<compile_context>
chip_gen: v7x
topology: tpu7x:2x2x1
jax: 0.10.0
libtpu: 0.0.40
codegen_flags: <defaults>
</compile_context>

<pallas_src>
import functools

import jax
import jax.numpy as jnp
import numpy as np
from jax.experimental import pallas as pl
from jax.experimental.pallas import tpu as pltpu


# ----------------------------------------------------------------------------
# Fused kernel: one grid step == one batch element.
# ----------------------------------------------------------------------------
def _mha_bow_kernel(q_ref, k_ref, v_ref,
                    wq_ref, bq_ref, wk_ref, bk_ref, wv_ref, bv_ref,
                    wfc_ref, bfc_ref, gamma_ref, beta_ref,
                    out_ref, attn_ref,
                    *, n_head, d_k, d_v, scale):
    xq = q_ref[0].astype(jnp.float32)                       # (Lq, D)
    xk = k_ref[0].astype(jnp.float32)                       # (Lk, D)
    xv = v_ref[0].astype(jnp.float32)                       # (Lv, D)

    # Fused Q / K / V projections (MXU, f32 accumulation).
    Q = jnp.dot(xq, wq_ref[...], preferred_element_type=jnp.float32) + bq_ref[...]
    K = jnp.dot(xk, wk_ref[...], preferred_element_type=jnp.float32) + bk_ref[...]
    V = jnp.dot(xv, wv_ref[...], preferred_element_type=jnp.float32) + bv_ref[...]

    # Per-head scaled dot-product attention; n_head is small and static, so a
    # static unroll with lane slices avoids any batched-dot relayout.
    ctx_heads = []
    attn_heads = []
    for h in range(n_head):
        Qh = Q[:, h * d_k:(h + 1) * d_k]                     # (Lq, d_k)
        Kh = K[:, h * d_k:(h + 1) * d_k]                     # (Lk, d_k)
        Vh = V[:, h * d_v:(h + 1) * d_v]                     # (Lk, d_v)

        s = jnp.dot(Qh, Kh.T, preferred_element_type=jnp.float32) * scale
        # TODO(synk): optional boolean attention mask (masked_fill -> -1e12)
        # not wired up; this kernel implements the mask=None path only.
        s = s - jnp.max(s, axis=-1, keepdims=True)           # stable softmax
        p = jnp.exp(s)
        a = p / jnp.sum(p, axis=-1, keepdims=True)           # (Lq, Lk)
        attn_heads.append(a)
        ctx_heads.append(jnp.dot(a, Vh, preferred_element_type=jnp.float32))

    ctx = jnp.concatenate(ctx_heads, axis=-1)                # (Lq, n_head*d_v)
    attn = jnp.stack(attn_heads, axis=0)                     # (n_head, Lq, Lk)

    # Output projection + residual + LayerNorm (dropout == identity in eval).
    proj = jnp.dot(ctx, wfc_ref[...], preferred_element_type=jnp.float32) + bfc_ref[...]
    z = proj + xq
    mean = jnp.mean(z, axis=-1, keepdims=True)
    var = jnp.mean((z - mean) ** 2, axis=-1, keepdims=True)  # biased, PyTorch-style
    zn = (z - mean) * jax.lax.rsqrt(var + 1e-5)
    y = zn * gamma_ref[...] + beta_ref[...]

    out_ref[...] = y[None, :, :].astype(out_ref.dtype)
    attn_ref[...] = attn[:, None, :, :].astype(attn_ref.dtype)


# ----------------------------------------------------------------------------
# Wrapper
# ----------------------------------------------------------------------------
@functools.partial(jax.jit, static_argnames=("n_head", "d_k", "d_v"))
def mha_bow_forward(params, q, k, v, *, n_head, d_k, d_v):
    B, Lq, D = q.shape
    _, Lk, _ = k.shape
    _, Lv, _ = v.shape
    scale = 1.0 / float(np.power(d_k, 0.5))

    kernel = functools.partial(_mha_bow_kernel, n_head=n_head, d_k=d_k,
                               d_v=d_v, scale=scale)

    def full2d(arr):
        # Whole (small) weight / bias tile, same block for every grid step.
        return pl.BlockSpec(arr.shape, lambda b: (0, 0))

    in_specs = [
        pl.BlockSpec((1, Lq, D), lambda b: (b, 0, 0)),        # q
        pl.BlockSpec((1, Lk, D), lambda b: (b, 0, 0)),        # k
        pl.BlockSpec((1, Lv, D), lambda b: (b, 0, 0)),        # v
        full2d(params["wq"]), full2d(params["bq"]),
        full2d(params["wk"]), full2d(params["bk"]),
        full2d(params["wv"]), full2d(params["bv"]),
        full2d(params["wfc"]), full2d(params["bfc"]),
        full2d(params["gamma"]), full2d(params["beta"]),
    ]
    out_specs = [
        pl.BlockSpec((1, Lq, D), lambda b: (b, 0, 0)),                 # output
        pl.BlockSpec((n_head, 1, Lq, Lk), lambda b: (0, b, 0, 0)),     # attn
    ]
    out_shapes = (
        jax.ShapeDtypeStruct((B, Lq, D), q.dtype),
        jax.ShapeDtypeStruct((n_head, B, Lq, Lk), jnp.float32),
    )

    out, attn = pl.pallas_call(
        kernel,
        out_shape=out_shapes,
        grid_spec=pltpu.PrefetchScalarGridSpec(
            num_scalar_prefetch=0,
            grid=(B,),
            in_specs=in_specs,
            out_specs=out_specs,
        ),
        compiler_params=pltpu.CompilerParams(
            dimension_semantics=("parallel",)),
    )(q, k, v,
      params["wq"], params["bq"], params["wk"], params["bk"],
      params["wv"], params["bv"], params["wfc"], params["bfc"],
      params["gamma"], params["beta"])

    # Match torch's return layout: attn is (n_head*sz_b, len_q, len_k),
    # head-major over the flattened batch dim.
    return out, attn.reshape(n_head * B, Lq, Lk)


# ----------------------------------------------------------------------------
# Parameter init (mirrors the PyTorch module's init scheme; deterministic)
# ----------------------------------------------------------------------------
def init_params(key, n_head, d_model, d_k, d_v):
    ks = jax.random.split(key, 8)
    std_qk = float(np.sqrt(2.0 / (d_model + d_k)))
    std_v = float(np.sqrt(2.0 / (d_model + d_v)))
    std_fc = float(np.sqrt(2.0 / (n_head * d_v + d_model)))   # xavier_normal
    b_in = 1.0 / float(np.sqrt(d_model))
    b_fc = 1.0 / float(np.sqrt(n_head * d_v))
    return dict(
        wq=std_qk * jax.random.normal(ks[0], (d_model, n_head * d_k), jnp.float32),
        wk=std_qk * jax.random.normal(ks[1], (d_model, n_head * d_k), jnp.float32),
        wv=std_v * jax.random.normal(ks[2], (d_model, n_head * d_v), jnp.float32),
        bq=jax.random.uniform(ks[3], (1, n_head * d_k), jnp.float32, -b_in, b_in),
        bk=jax.random.uniform(ks[4], (1, n_head * d_k), jnp.float32, -b_in, b_in),
        bv=jax.random.uniform(ks[5], (1, n_head * d_v), jnp.float32, -b_in, b_in),
        wfc=std_fc * jax.random.normal(ks[6], (n_head * d_v, d_model), jnp.float32),
        bfc=jax.random.uniform(ks[7], (1, d_model), jnp.float32, -b_fc, b_fc),
        gamma=jnp.ones((1, d_model), jnp.float32),             # LayerNorm weight
        beta=jnp.zeros((1, d_model), jnp.float32),              # LayerNorm bias
    )


# ----------------------------------------------------------------------------
# Pure-JAX reference (mirrors the PyTorch forward exactly) for a sanity check
# ----------------------------------------------------------------------------
def _reference(params, q, k, v, n_head, d_k, d_v):
    B, Lq, _ = q.shape
    _, Lk, _ = k.shape
    residual = q
    Q = q @ params["wq"] + params["bq"]
    K = k @ params["wk"] + params["bk"]
    V = v @ params["wv"] + params["bv"]
    Q = Q.reshape(B, Lq, n_head, d_k).transpose(2, 0, 1, 3).reshape(n_head * B, Lq, d_k)
    K = K.reshape(B, Lk, n_head, d_k).transpose(2, 0, 1, 3).reshape(n_head * B, Lk, d_k)
    V = V.reshape(B, Lk, n_head, d_v).transpose(2, 0, 1, 3).reshape(n_head * B, Lk, d_v)
    attn = jnp.einsum("bqd,bkd->bqk", Q, K) / np.power(d_k, 0.5)
    attn = jax.nn.softmax(attn, axis=2)
    out = jnp.einsum("bqk,bkd->bqd", attn, V)
    out = out.reshape(n_head, B, Lq, d_v).transpose(1, 2, 0, 3).reshape(B, Lq, n_head * d_v)
    out = out @ params["wfc"] + params["bfc"]
    z = out + residual
    mean = z.mean(-1, keepdims=True)
    var = ((z - mean) ** 2).mean(-1, keepdims=True)
    y = (z - mean) / jnp.sqrt(var + 1e-5) * params["gamma"] + params["beta"]
    return y, attn


if __name__ == "__main__":
    # Small shapes consistent with the module.
    sz_b, len_q, len_k, len_v = 2, 8, 8, 8
    n_head, d_model, d_k, d_v = 4, 128, 32, 32

    key = jax.random.PRNGKey(0)
    kp, kq, kk, kv = jax.random.split(key, 4)
    params = init_params(kp, n_head, d_model, d_k, d_v)
    q = jax.random.normal(kq, (sz_b, len_q, d_model), jnp.float32)
    k = jax.random.normal(kk, (sz_b, len_k, d_model), jnp.float32)
    v = jax.random.normal(kv, (sz_b, len_v, d_model), jnp.float32)

    out, attn = mha_bow_forward(params, q, k, v, n_head=n_head, d_k=d_k, d_v=d_v)
    jax.block_until_ready((out, attn))

    assert out.shape == (sz_b, len_q, d_model)
    assert attn.shape == (n_head * sz_b, len_q, len_k)

    ref_out, ref_attn = _reference(params, q, k, v, n_head, d_k, d_v)
    np.testing.assert_allclose(np.asarray(out), np.asarray(ref_out),
                               atol=2e-4, rtol=2e-4)
    np.testing.assert_allclose(np.asarray(attn), np.asarray(ref_attn),
                               atol=2e-4, rtol=2e-4)
    print("KERNEL_OK")
</pallas_src>

<mosaic_0001>
module attributes {stable_mosaic.version = 11 : i64} {
  func.func @_mha_bow_kernel(%arg0: i32, %arg1: memref<1x8x128xf32, #tpu.memory_space<vmem>>, %arg2: memref<1x8x128xf32, #tpu.memory_space<vmem>>, %arg3: memref<1x8x128xf32, #tpu.memory_space<vmem>>, %arg4: memref<128x128xf32, #tpu.memory_space<vmem>>, %arg5: memref<1x128xf32, #tpu.memory_space<vmem>>, %arg6: memref<128x128xf32, #tpu.memory_space<vmem>>, %arg7: memref<1x128xf32, #tpu.memory_space<vmem>>, %arg8: memref<128x128xf32, #tpu.memory_space<vmem>>, %arg9: memref<1x128xf32, #tpu.memory_space<vmem>>, %arg10: memref<128x128xf32, #tpu.memory_space<vmem>>, %arg11: memref<1x128xf32, #tpu.memory_space<vmem>>, %arg12: memref<1x128xf32, #tpu.memory_space<vmem>>, %arg13: memref<1x128xf32, #tpu.memory_space<vmem>>, %arg14: memref<1x8x128xf32, #tpu.memory_space<vmem>>, %arg15: memref<4x1x8x8xf32, #tpu.memory_space<vmem>>) attributes {dimension_semantics = [#tpu.dimension_semantics<parallel>], iteration_bounds = array<i64: 2>, scalar_prefetch = 0 : i64, scratch_operands = 0 : i64, tpu.core_type = #tpu.core_type<tc>, window_params = [{transform_indices = @transform_0, window_bounds = array<i64: 1, 8, 128>}, {transform_indices = @transform_1, window_bounds = array<i64: 1, 8, 128>}, {transform_indices = @transform_2, window_bounds = array<i64: 1, 8, 128>}, {pipeline_mode = #tpu.pipeline_mode<synchronous>, transform_indices = @transform_3, window_bounds = array<i64: 128, 128>}, {pipeline_mode = #tpu.pipeline_mode<synchronous>, transform_indices = @transform_4, window_bounds = array<i64: 1, 128>}, {pipeline_mode = #tpu.pipeline_mode<synchronous>, transform_indices = @transform_5, window_bounds = array<i64: 128, 128>}, {pipeline_mode = #tpu.pipeline_mode<synchronous>, transform_indices = @transform_6, window_bounds = array<i64: 1, 128>}, {pipeline_mode = #tpu.pipeline_mode<synchronous>, transform_indices = @transform_7, window_bounds = array<i64: 128, 128>}, {pipeline_mode = #tpu.pipeline_mode<synchronous>, transform_indices = @transform_8, window_bounds = array<i64: 1, 128>}, {pipeline_mode = #tpu.pipeline_mode<synchronous>, transform_indices = @transform_9, window_bounds = array<i64: 128, 128>}, {pipeline_mode = #tpu.pipeline_mode<synchronous>, transform_indices = @transform_10, window_bounds = array<i64: 1, 128>}, {pipeline_mode = #tpu.pipeline_mode<synchronous>, transform_indices = @transform_11, window_bounds = array<i64: 1, 128>}, {pipeline_mode = #tpu.pipeline_mode<synchronous>, transform_indices = @transform_12, window_bounds = array<i64: 1, 128>}, {transform_indices = @transform_13, window_bounds = array<i64: 1, 8, 128>}, {transform_indices = @transform_14, window_bounds = array<i64: 4, 1, 8, 8>}]} {
    %c0 = arith.constant 0 : index
    %c0_0 = arith.constant 0 : index
    %c0_1 = arith.constant 0 : index
    %0 = vector.load %arg1[%c0, %c0_0, %c0_1] : memref<1x8x128xf32, #tpu.memory_space<vmem>>, vector<1x8x128xf32>
    %1 = vector.shape_cast %0 : vector<1x8x128xf32> to vector<8x128xf32>
    %c0_2 = arith.constant 0 : index
    %c0_3 = arith.constant 0 : index
    %c0_4 = arith.constant 0 : index
    %2 = vector.load %arg2[%c0_2, %c0_3, %c0_4] : memref<1x8x128xf32, #tpu.memory_space<vmem>>, vector<1x8x128xf32>
    %3 = vector.shape_cast %2 : vector<1x8x128xf32> to vector<8x128xf32>
    %c0_5 = arith.constant 0 : index
    %c0_6 = arith.constant 0 : index
    %c0_7 = arith.constant 0 : index
    %4 = vector.load %arg3[%c0_5, %c0_6, %c0_7] : memref<1x8x128xf32, #tpu.memory_space<vmem>>, vector<1x8x128xf32>
    %5 = vector.shape_cast %4 : vector<1x8x128xf32> to vector<8x128xf32>
    %c0_8 = arith.constant 0 : index
    %c0_9 = arith.constant 0 : index
    %6 = vector.load %arg4[%c0_8, %c0_9] : memref<128x128xf32, #tpu.memory_space<vmem>>, vector<128x128xf32>
    %cst = arith.constant dense<0.000000e+00> : vector<8x128xf32>
    %7 = tpu.matmul %1, %6, %cst {dimension_numbers = #tpu.dot_dimension_numbers<[1], [0], [0], [1], [0, 0, 1, 1], [], []>} : vector<8x128xf32>, vector<128x128xf32>, vector<8x128xf32> -> vector<8x128xf32>
    %c0_10 = arith.constant 0 : index
    %c0_11 = arith.constant 0 : index
    %8 = vector.load %arg5[%c0_10, %c0_11] : memref<1x128xf32, #tpu.memory_space<vmem>>, vector<1x128xf32>
    %9 = vector.broadcast %8 : vector<1x128xf32> to vector<8x128xf32>
    %10 = arith.addf %7, %9 : vector<8x128xf32>
    %c0_12 = arith.constant 0 : index
    %c0_13 = arith.constant 0 : index
    %11 = vector.load %arg6[%c0_12, %c0_13] : memref<128x128xf32, #tpu.memory_space<vmem>>, vector<128x128xf32>
    %cst_14 = arith.constant dense<0.000000e+00> : vector<8x128xf32>
    %12 = tpu.matmul %3, %11, %cst_14 {dimension_numbers = #tpu.dot_dimension_numbers<[1], [0], [0], [1], [0, 0, 1, 1], [], []>} : vector<8x128xf32>, vector<128x128xf32>, vector<8x128xf32> -> vector<8x128xf32>
    %c0_15 = arith.constant 0 : index
    %c0_16 = arith.constant 0 : index
    %13 = vector.load %arg7[%c0_15, %c0_16] : memref<1x128xf32, #tpu.memory_space<vmem>>, vector<1x128xf32>
    %14 = vector.broadcast %13 : vector<1x128xf32> to vector<8x128xf32>
    %15 = arith.addf %12, %14 : vector<8x128xf32>
    %c0_17 = arith.constant 0 : index
    %c0_18 = arith.constant 0 : index
    %16 = vector.load %arg8[%c0_17, %c0_18] : memref<128x128xf32, #tpu.memory_space<vmem>>, vector<128x128xf32>
    %cst_19 = arith.constant dense<0.000000e+00> : vector<8x128xf32>
    %17 = tpu.matmul %5, %16, %cst_19 {dimension_numbers = #tpu.dot_dimension_numbers<[1], [0], [0], [1], [0, 0, 1, 1], [], []>} : vector<8x128xf32>, vector<128x128xf32>, vector<8x128xf32> -> vector<8x128xf32>
    %c0_20 = arith.constant 0 : index
    %c0_21 = arith.constant 0 : index
    %18 = vector.load %arg9[%c0_20, %c0_21] : memref<1x128xf32, #tpu.memory_space<vmem>>, vector<1x128xf32>
    %19 = vector.broadcast %18 : vector<1x128xf32> to vector<8x128xf32>
    %20 = arith.addf %17, %19 : vector<8x128xf32>
    %21 = vector.extract_strided_slice %10 {offsets = [0, 0], sizes = [8, 32], strides = [1, 1]} : vector<8x128xf32> to vector<8x32xf32>
    %22 = vector.extract_strided_slice %15 {offsets = [0, 0], sizes = [8, 32], strides = [1, 1]} : vector<8x128xf32> to vector<8x32xf32>
    %23 = vector.extract_strided_slice %20 {offsets = [0, 0], sizes = [8, 32], strides = [1, 1]} : vector<8x128xf32> to vector<8x32xf32>
    %24 = tpu.transpose %22, [1, 0] : vector<8x32xf32> -> vector<32x8xf32>
    %cst_22 = arith.constant dense<0.000000e+00> : vector<8x8xf32>
    %25 = tpu.matmul %21, %24, %cst_22 {dimension_numbers = #tpu.dot_dimension_numbers<[1], [0], [0], [1], [0, 0, 1, 1], [], []>} : vector<8x32xf32>, vector<32x8xf32>, vector<8x8xf32> -> vector<8x8xf32>
    %cst_23 = arith.constant 0.176776692 : f32
    %26 = vector.broadcast %cst_23 : f32 to vector<8x8xf32>
    %27 = arith.mulf %25, %26 : vector<8x8xf32>
    %cst_24 = arith.constant dense<0xFF800000> : vector<8xf32>
    %28 = vector.multi_reduction <maximumf>, %27, %cst_24 [1] : vector<8x8xf32> to vector<8xf32>
    %29 = vector.shape_cast %28 : vector<8xf32> to vector<8x1xf32>
    %30 = vector.broadcast %29 : vector<8x1xf32> to vector<8x8xf32>
    %31 = arith.subf %27, %30 : vector<8x8xf32>
    %32 = math.exp %31 : vector<8x8xf32>
    %cst_25 = arith.constant dense<0.000000e+00> : vector<8xf32>
    %33 = vector.multi_reduction <add>, %32, %cst_25 [1] : vector<8x8xf32> to vector<8xf32>
    %34 = vector.shape_cast %33 : vector<8xf32> to vector<8x1xf32>
    %35 = vector.broadcast %34 : vector<8x1xf32> to vector<8x8xf32>
    %36 = arith.divf %32, %35 : vector<8x8xf32>
    %cst_26 = arith.constant dense<0.000000e+00> : vector<8x32xf32>
    %37 = tpu.matmul %36, %23, %cst_26 {dimension_numbers = #tpu.dot_dimension_numbers<[1], [0], [0], [1], [0, 0, 1, 1], [], []>} : vector<8x8xf32>, vector<8x32xf32>, vector<8x32xf32> -> vector<8x32xf32>
    %38 = vector.extract_strided_slice %10 {offsets = [0, 32], sizes = [8, 32], strides = [1, 1]} : vector<8x128xf32> to vector<8x32xf32>
    %39 = vector.extract_strided_slice %15 {offsets = [0, 32], sizes = [8, 32], strides = [1, 1]} : vector<8x128xf32> to vector<8x32xf32>
    %40 = vector.extract_strided_slice %20 {offsets = [0, 32], sizes = [8, 32], strides = [1, 1]} : vector<8x128xf32> to vector<8x32xf32>
    %41 = tpu.transpose %39, [1, 0] : vector<8x32xf32> -> vector<32x8xf32>
    %cst_27 = arith.constant dense<0.000000e+00> : vector<8x8xf32>
    %42 = tpu.matmul %38, %41, %cst_27 {dimension_numbers = #tpu.dot_dimension_numbers<[1], [0], [0], [1], [0, 0, 1, 1], [], []>} : vector<8x32xf32>, vector<32x8xf32>, vector<8x8xf32> -> vector<8x8xf32>
    %cst_28 = arith.constant 0.176776692 : f32
    %43 = vector.broadcast %cst_28 : f32 to vector<8x8xf32>
    %44 = arith.mulf %42, %43 : vector<8x8xf32>
    %cst_29 = arith.constant dense<0xFF800000> : vector<8xf32>
    %45 = vector.multi_reduction <maximumf>, %44, %cst_29 [1] : vector<8x8xf32> to vector<8xf32>
    %46 = vector.shape_cast %45 : vector<8xf32> to vector<8x1xf32>
    %47 = vector.broadcast %46 : vector<8x1xf32> to vector<8x8xf32>
    %48 = arith.subf %44, %47 : vector<8x8xf32>
    %49 = math.exp %48 : vector<8x8xf32>
    %cst_30 = arith.constant dense<0.000000e+00> : vector<8xf32>
    %50 = vector.multi_reduction <add>, %49, %cst_30 [1] : vector<8x8xf32> to vector<8xf32>
    %51 = vector.shape_cast %50 : vector<8xf32> to vector<8x1xf32>
    %52 = vector.broadcast %51 : vector<8x1xf32> to vector<8x8xf32>
    %53 = arith.divf %49, %52 : vector<8x8xf32>
    %cst_31 = arith.constant dense<0.000000e+00> : vector<8x32xf32>
    %54 = tpu.matmul %53, %40, %cst_31 {dimension_numbers = #tpu.dot_dimension_numbers<[1], [0], [0], [1], [0, 0, 1, 1], [], []>} : vector<8x8xf32>, vector<8x32xf32>, vector<8x32xf32> -> vector<8x32xf32>
    %55 = vector.extract_strided_slice %10 {offsets = [0, 64], sizes = [8, 32], strides = [1, 1]} : vector<8x128xf32> to vector<8x32xf32>
    %56 = vector.extract_strided_slice %15 {offsets = [0, 64], sizes = [8, 32], strides = [1, 1]} : vector<8x128xf32> to vector<8x32xf32>
    %57 = vector.extract_strided_slice %20 {offsets = [0, 64], sizes = [8, 32], strides = [1, 1]} : vector<8x128xf32> to vector<8x32xf32>
    %58 = tpu.transpose %56, [1, 0] : vector<8x32xf32> -> vector<32x8xf32>
    %cst_32 = arith.constant dense<0.000000e+00> : vector<8x8xf32>
    %59 = tpu.matmul %55, %58, %cst_32 {dimension_numbers = #tpu.dot_dimension_numbers<[1], [0], [0], [1], [0, 0, 1, 1], [], []>} : vector<8x32xf32>, vector<32x8xf32>, vector<8x8xf32> -> vector<8x8xf32>
    %cst_33 = arith.constant 0.176776692 : f32
    %60 = vector.broadcast %cst_33 : f32 to vector<8x8xf32>
    %61 = arith.mulf %59, %60 : vector<8x8xf32>
    %cst_34 = arith.constant dense<0xFF800000> : vector<8xf32>
    %62 = vector.multi_reduction <maximumf>, %61, %cst_34 [1] : vector<8x8xf32> to vector<8xf32>
    %63 = vector.shape_cast %62 : vector<8xf32> to vector<8x1xf32>
    %64 = vector.broadcast %63 : vector<8x1xf32> to vector<8x8xf32>
    %65 = arith.subf %61, %64 : vector<8x8xf32>
    %66 = math.exp %65 : vector<8x8xf32>
    %cst_35 = arith.constant dense<0.000000e+00> : vector<8xf32>
    %67 = vector.multi_reduction <add>, %66, %cst_35 [1] : vector<8x8xf32> to vector<8xf32>
    %68 = vector.shape_cast %67 : vector<8xf32> to vector<8x1xf32>
    %69 = vector.broadcast %68 : vector<8x1xf32> to vector<8x8xf32>
    %70 = arith.divf %66, %69 : vector<8x8xf32>
    %cst_36 = arith.constant dense<0.000000e+00> : vector<8x32xf32>
    %71 = tpu.matmul %70, %57, %cst_36 {dimension_numbers = #tpu.dot_dimension_numbers<[1], [0], [0], [1], [0, 0, 1, 1], [], []>} : vector<8x8xf32>, vector<8x32xf32>, vector<8x32xf32> -> vector<8x32xf32>
    %72 = vector.extract_strided_slice %10 {offsets = [0, 96], sizes = [8, 32], strides = [1, 1]} : vector<8x128xf32> to vector<8x32xf32>
    %73 = vector.extract_strided_slice %15 {offsets = [0, 96], sizes = [8, 32], strides = [1, 1]} : vector<8x128xf32> to vector<8x32xf32>
    %74 = vector.extract_strided_slice %20 {offsets = [0, 96], sizes = [8, 32], strides = [1, 1]} : vector<8x128xf32> to vector<8x32xf32>
    %75 = tpu.transpose %73, [1, 0] : vector<8x32xf32> -> vector<32x8xf32>
    %cst_37 = arith.constant dense<0.000000e+00> : vector<8x8xf32>
    %76 = tpu.matmul %72, %75, %cst_37 {dimension_numbers = #tpu.dot_dimension_numbers<[1], [0], [0], [1], [0, 0, 1, 1], [], []>} : vector<8x32xf32>, vector<32x8xf32>, vector<8x8xf32> -> vector<8x8xf32>
    %cst_38 = arith.constant 0.176776692 : f32
    %77 = vector.broadcast %cst_38 : f32 to vector<8x8xf32>
    %78 = arith.mulf %76, %77 : vector<8x8xf32>
    %cst_39 = arith.constant dense<0xFF800000> : vector<8xf32>
    %79 = vector.multi_reduction <maximumf>, %78, %cst_39 [1] : vector<8x8xf32> to vector<8xf32>
    %80 = vector.shape_cast %79 : vector<8xf32> to vector<8x1xf32>
    %81 = vector.broadcast %80 : vector<8x1xf32> to vector<8x8xf32>
    %82 = arith.subf %78, %81 : vector<8x8xf32>
    %83 = math.exp %82 : vector<8x8xf32>
    %cst_40 = arith.constant dense<0.000000e+00> : vector<8xf32>
    %84 = vector.multi_reduction <add>, %83, %cst_40 [1] : vector<8x8xf32> to vector<8xf32>
    %85 = vector.shape_cast %84 : vector<8xf32> to vector<8x1xf32>
    %86 = vector.broadcast %85 : vector<8x1xf32> to vector<8x8xf32>
    %87 = arith.divf %83, %86 : vector<8x8xf32>
    %cst_41 = arith.constant dense<0.000000e+00> : vector<8x32xf32>
    %88 = tpu.matmul %87, %74, %cst_41 {dimension_numbers = #tpu.dot_dimension_numbers<[1], [0], [0], [1], [0, 0, 1, 1], [], []>} : vector<8x8xf32>, vector<8x32xf32>, vector<8x32xf32> -> vector<8x32xf32>
    %89 = tpu.concatenate %37, %54, %71, %88 in 1 : vector<8x32xf32>, vector<8x32xf32>, vector<8x32xf32>, vector<8x32xf32> -> vector<8x128xf32>
    %90 = vector.shape_cast %36 : vector<8x8xf32> to vector<1x8x8xf32>
    %91 = vector.shape_cast %53 : vector<8x8xf32> to vector<1x8x8xf32>
    %92 = vector.shape_cast %70 : vector<8x8xf32> to vector<1x8x8xf32>
    %93 = vector.shape_cast %87 : vector<8x8xf32> to vector<1x8x8xf32>
    %94 = tpu.concatenate %90, %91, %92, %93 in 0 : vector<1x8x8xf32>, vector<1x8x8xf32>, vector<1x8x8xf32>, vector<1x8x8xf32> -> vector<4x8x8xf32>
    %c0_42 = arith.constant 0 : index
    %c0_43 = arith.constant 0 : index
    %95 = vector.load %arg10[%c0_42, %c0_43] : memref<128x128xf32, #tpu.memory_space<vmem>>, vector<128x128xf32>
    %cst_44 = arith.constant dense<0.000000e+00> : vector<8x128xf32>
    %96 = tpu.matmul %89, %95, %cst_44 {dimension_numbers = #tpu.dot_dimension_numbers<[1], [0], [0], [1], [0, 0, 1, 1], [], []>} : vector<8x128xf32>, vector<128x128xf32>, vector<8x128xf32> -> vector<8x128xf32>
    %c0_45 = arith.constant 0 : index
    %c0_46 = arith.constant 0 : index
    %97 = vector.load %arg11[%c0_45, %c0_46] : memref<1x128xf32, #tpu.memory_space<vmem>>, vector<1x128xf32>
    %98 = vector.broadcast %97 : vector<1x128xf32> to vector<8x128xf32>
    %99 = arith.addf %96, %98 : vector<8x128xf32>
    %100 = arith.addf %99, %1 : vector<8x128xf32>
    %cst_47 = arith.constant dense<0.000000e+00> : vector<8xf32>
    %101 = vector.multi_reduction <add>, %100, %cst_47 [1] : vector<8x128xf32> to vector<8xf32>
    %102 = vector.shape_cast %101 : vector<8xf32> to vector<8x1xf32>
    %cst_48 = arith.constant 1.280000e+02 : f32
    %103 = vector.broadcast %cst_48 : f32 to vector<8x1xf32>
    %104 = arith.divf %102, %103 : vector<8x1xf32>
    %105 = vector.broadcast %104 : vector<8x1xf32> to vector<8x128xf32>
    %106 = arith.subf %100, %105 : vector<8x128xf32>
    %107 = arith.mulf %106, %106 : vector<8x128xf32>
    %cst_49 = arith.constant dense<0.000000e+00> : vector<8xf32>
    %108 = vector.multi_reduction <add>, %107, %cst_49 [1] : vector<8x128xf32> to vector<8xf32>
    %109 = vector.shape_cast %108 : vector<8xf32> to vector<8x1xf32>
    %cst_50 = arith.constant 1.280000e+02 : f32
    %110 = vector.broadcast %cst_50 : f32 to vector<8x1xf32>
    %111 = arith.divf %109, %110 : vector<8x1xf32>
    %112 = vector.broadcast %104 : vector<8x1xf32> to vector<8x128xf32>
    %113 = arith.subf %100, %112 : vector<8x128xf32>
    %cst_51 = arith.constant 9.99999974E-6 : f32
    %114 = vector.broadcast %cst_51 : f32 to vector<8x1xf32>
    %115 = arith.addf %111, %114 : vector<8x1xf32>
    %116 = math.rsqrt %115 : vector<8x1xf32>
    %117 = vector.broadcast %116 : vector<8x1xf32> to vector<8x128xf32>
    %118 = arith.mulf %113, %117 : vector<8x128xf32>
    %c0_52 = arith.constant 0 : index
    %c0_53 = arith.constant 0 : index
    %119 = vector.load %arg12[%c0_52, %c0_53] : memref<1x128xf32, #tpu.memory_space<vmem>>, vector<1x128xf32>
    %120 = vector.broadcast %119 : vector<1x128xf32> to vector<8x128xf32>
    %121 = arith.mulf %118, %120 : vector<8x128xf32>
    %c0_54 = arith.constant 0 : index
    %c0_55 = arith.constant 0 : index
    %122 = vector.load %arg13[%c0_54, %c0_55] : memref<1x128xf32, #tpu.memory_space<vmem>>, vector<1x128xf32>
    %123 = vector.broadcast %122 : vector<1x128xf32> to vector<8x128xf32>
    %124 = arith.addf %121, %123 : vector<8x128xf32>
    %125 = vector.shape_cast %124 : vector<8x128xf32> to vector<1x8x128xf32>
    %c0_56 = arith.constant 0 : index
    %c0_57 = arith.constant 0 : index
    %c0_58 = arith.constant 0 : index
    %126 = vector.load %arg14[%c0_56, %c0_57, %c0_58] : memref<1x8x128xf32, #tpu.memory_space<vmem>>, vector<1x8x128xf32>
    tpu.vector_store %arg14[%c0_56, %c0_57, %c0_58], %125 {strides = array<i32>} : memref<1x8x128xf32, #tpu.memory_space<vmem>>, vector<1x8x128xf32>,
    %127 = vector.shape_cast %94 : vector<4x8x8xf32> to vector<4x1x8x8xf32>
    %c0_59 = arith.constant 0 : index
    %c0_60 = arith.constant 0 : index
    %c0_61 = arith.constant 0 : index
    %c0_62 = arith.constant 0 : index
    %128 = vector.load %arg15[%c0_59, %c0_60, %c0_61, %c0_62] : memref<4x1x8x8xf32, #tpu.memory_space<vmem>>, vector<4x1x8x8xf32>
    tpu.vector_store %arg15[%c0_59, %c0_60, %c0_61, %c0_62], %127 {strides = array<i32>} : memref<4x1x8x8xf32, #tpu.memory_space<vmem>>, vector<4x1x8x8xf32>,
    return
  }
  func.func @transform_0(%arg0: i32) -> (i32, i32, i32) {
    %c0_i32 = arith.constant 0 : i32
    %c0_i32_0 = arith.constant 0 : i32
    %c0_i32_1 = arith.constant 0 : i32
    return %arg0, %c0_i32, %c0_i32_0 : i32, i32, i32
  }
  func.func @transform_1(%arg0: i32) -> (i32, i32, i32) {
    %c0_i32 = arith.constant 0 : i32
    %c0_i32_0 = arith.constant 0 : i32
    %c0_i32_1 = arith.constant 0 : i32
    return %arg0, %c0_i32, %c0_i32_0 : i32, i32, i32
  }
  func.func @transform_2(%arg0: i32) -> (i32, i32, i32) {
    %c0_i32 = arith.constant 0 : i32
    %c0_i32_0 = arith.constant 0 : i32
    %c0_i32_1 = arith.constant 0 : i32
    return %arg0, %c0_i32, %c0_i32_0 : i32, i32, i32
  }
  func.func @transform_3(%arg0: i32) -> (i32, i32) {
    %c0_i32 = arith.constant 0 : i32
    %c0_i32_0 = arith.constant 0 : i32
    %c0_i32_1 = arith.constant 0 : i32
    return %c0_i32, %c0_i32_0 : i32, i32
  }
  func.func @transform_4(%arg0: i32) -> (i32, i32) {
    %c0_i32 = arith.constant 0 : i32
    %c0_i32_0 = arith.constant 0 : i32
    %c0_i32_1 = arith.constant 0 : i32
    return %c0_i32, %c0_i32_0 : i32, i32
  }
  func.func @transform_5(%arg0: i32) -> (i32, i32) {
    %c0_i32 = arith.constant 0 : i32
    %c0_i32_0 = arith.constant 0 : i32
    %c0_i32_1 = arith.constant 0 : i32
    return %c0_i32, %c0_i32_0 : i32, i32
  }
  func.func @transform_6(%arg0: i32) -> (i32, i32) {
    %c0_i32 = arith.constant 0 : i32
    %c0_i32_0 = arith.constant 0 : i32
    %c0_i32_1 = arith.constant 0 : i32
    return %c0_i32, %c0_i32_0 : i32, i32
  }
  func.func @transform_7(%arg0: i32) -> (i32, i32) {
    %c0_i32 = arith.constant 0 : i32
    %c0_i32_0 = arith.constant 0 : i32
    %c0_i32_1 = arith.constant 0 : i32
    return %c0_i32, %c0_i32_0 : i32, i32
  }
  func.func @transform_8(%arg0: i32) -> (i32, i32) {
    %c0_i32 = arith.constant 0 : i32
    %c0_i32_0 = arith.constant 0 : i32
    %c0_i32_1 = arith.constant 0 : i32
    return %c0_i32, %c0_i32_0 : i32, i32
  }
  func.func @transform_9(%arg0: i32) -> (i32, i32) {
    %c0_i32 = arith.constant 0 : i32
    %c0_i32_0 = arith.constant 0 : i32
    %c0_i32_1 = arith.constant 0 : i32
    return %c0_i32, %c0_i32_0 : i32, i32
  }
  func.func @transform_10(%arg0: i32) -> (i32, i32) {
    %c0_i32 = arith.constant 0 : i32
    %c0_i32_0 = arith.constant 0 : i32
    %c0_i32_1 = arith.constant 0 : i32
    return %c0_i32, %c0_i32_0 : i32, i32
  }
  func.func @transform_11(%arg0: i32) -> (i32, i32) {
    %c0_i32 = arith.constant 0 : i32
    %c0_i32_0 = arith.constant 0 : i32
    %c0_i32_1 = arith.constant 0 : i32
    return %c0_i32, %c0_i32_0 : i32, i32
  }
  func.func @transform_12(%arg0: i32) -> (i32, i32) {
    %c0_i32 = arith.constant 0 : i32
    %c0_i32_0 = arith.constant 0 : i32
    %c0_i32_1 = arith.constant 0 : i32
    return %c0_i32, %c0_i32_0 : i32, i32
  }
  func.func @transform_13(%arg0: i32) -> (i32, i32, i32) {
    %c0_i32 = arith.constant 0 : i32
    %c0_i32_0 = arith.constant 0 : i32
    %c0_i32_1 = arith.constant 0 : i32
    return %arg0, %c0_i32, %c0_i32_0 : i32, i32, i32
  }
  func.func @transform_14(%arg0: i32) -> (i32, i32, i32, i32) {
    %c0_i32 = arith.constant 0 : i32
    %c0_i32_0 = arith.constant 0 : i32
    %c0_i32_1 = arith.constant 0 : i32
    %c0_i32_2 = arith.constant 0 : i32
    return %c0_i32, %arg0, %c0_i32_0, %c0_i32_1 : i32, i32, i32, i32
  }
}

</mosaic_0001>

<llo_original>
// kernel: mha_bow_forward.1
$region0: #{mha_bow_forward.1}
  #allocation0 [shape = 'u32[]', space=smem, size = 0x4, offset = 0x4, fixed_abs, tag = 'smem constant byte address 0x4 - core index']
  #allocation1 [shape = 'u32[144,128]{1,0:T(1,128)}', space=vmem, size = 0x12000, scoped, tag = 'internal scratch']
  %s0 = inlined_call_operand.vmem [shape: f32[2,8,128], index: 0, kind: input, shape index: {}]
  %s1 = inlined_call_operand.vmem [shape: f32[2,8,128], index: 1, kind: input, shape index: {}]
  %s2 = inlined_call_operand.hbm [shape: f32[2,8,128], index: 2, kind: input, shape index: {}]
  %s3 = inlined_call_operand.hbm [shape: f32[128,128], index: 3, kind: input, shape index: {}]
  %s4 = inlined_call_operand.vmem [shape: f32[1,128], index: 4, kind: input, shape index: {}]
  %s5 = inlined_call_operand.hbm [shape: f32[128,128], index: 5, kind: input, shape index: {}]
  %s6 = inlined_call_operand.vmem [shape: f32[1,128], index: 6, kind: input, shape index: {}]
  %s7 = inlined_call_operand.hbm [shape: f32[128,128], index: 7, kind: input, shape index: {}]
  %s8 = inlined_call_operand.hbm [shape: f32[1,128], index: 8, kind: input, shape index: {}]
  %s9 = inlined_call_operand.hbm [shape: f32[128,128], index: 9, kind: input, shape index: {}]
  %s10 = inlined_call_operand.hbm [shape: f32[1,128], index: 10, kind: input, shape index: {}]
  %s11 = inlined_call_operand.hbm [shape: f32[1,128], index: 11, kind: input, shape index: {}]
  %s12 = inlined_call_operand.hbm [shape: f32[1,128], index: 12, kind: input, shape index: {}]
  %s13 = inlined_call_operand.hbm [shape: f32[2,8,128], index: 13, kind: output, shape index: {0}]
  %s14 = inlined_call_operand.hbm [shape: f32[4,2,8,8], index: 14, kind: output, shape index: {1}]
  %15 = xla_tuple %s13, %s14
  %s16 = sld [smem:[#allocation0]]
  $region129: #{mha_bow_forward.1} parent=0
    _
  %s18 = ssub.s32 1, %s16
  %s19 = scalar_select 0, %s18, %s16
  $region1: #{mha_bow_forward.1} parent=0
    #allocation2 [shape = 'u8[8192]{0}', space=vmem, size = 0x2000, scoped, tag = 'input window, operand 2']
    #allocation3 [shape = 's32[2]{0}', space=sflag, size = 0x8, scoped, tag = 'scoped memory for mha_bow_forward.1']
    #allocation4 [shape = 's32[2]{0}', space=sflag, size = 0x8, scoped, tag = 'scoped memory for mha_bow_forward.1']
    #allocation5 [shape = 'u8[65536]{0}', space=vmem, size = 0x10000, scoped, tag = 'input window, operand 3, single buffered']
    #allocation6 [shape = 's32[1]{0}', space=sflag, size = 0x4, scoped, tag = 'scoped memory for mha_bow_forward.1']
    #allocation7 [shape = 'u8[65536]{0}', space=vmem, size = 0x10000, scoped, tag = 'input window, operand 5, single buffered']
    #allocation8 [shape = 'u8[65536]{0}', space=vmem, size = 0x10000, scoped, tag = 'input window, operand 7, single buffered']
    #allocation9 [shape = 's32[1]{0}', space=sflag, size = 0x4, scoped, tag = 'scoped memory for mha_bow_forward.1']
    #allocation10 [shape = 'u8[512]{0}', space=vmem, size = 0x400, scoped, tag = 'input window, operand 8, single buffered']
    #allocation11 [shape = 'u8[65536]{0}', space=vmem, size = 0x10000, scoped, tag = 'input window, operand 9, single buffered']
    #allocation12 [shape = 's32[1]{0}', space=sflag, size = 0x4, scoped, tag = 'scoped memory for mha_bow_forward.1']
    #allocation13 [shape = 'u8[512]{0}', space=vmem, size = 0x400, scoped, tag = 'input window, operand 10, single buffered']
    #allocation14 [shape = 'u8[512]{0}', space=vmem, size = 0x400, scoped, tag = 'input window, operand 11, single buffered']
    #allocation15 [shape = 's32[1]{0}', space=sflag, size = 0x4, scoped, tag = 'scoped memory for mha_bow_forward.1']
    #allocation16 [shape = 'u8[512]{0}', space=vmem, size = 0x400, scoped, tag = 'input window, operand 12, single buffered']
    #allocation17 [shape = 'u8[8192]{0}', space=vmem, size = 0x2000, scoped, tag = 'output window, operand 0']
    #allocation18 [shape = 'u8[32768]{0}', space=vmem, size = 0x8000, scoped, tag = 'output window, operand 1']
    #allocation19 [shape = 's32[2]{0}', space=sflag, size = 0x8, scoped, tag = 'scoped memory for mha_bow_forward.1']
    %20 = vsyncpa [#allocation3], 0
    %s21 = scalar_lea.sflag [#allocation3], 1
    %22 = vsyncpa %s21, 0
    %23 = vsyncpa [#allocation6], 0
    %24 = vsyncpa [#allocation9], 0
    %25 = vsyncpa [#allocation12], 0
    %26 = vsyncpa [#allocation15], 0
    %27 = vsyncpa [#allocation4], 0
    %s28 = scalar_lea.sflag [#allocation4], 1
    %29 = vsyncpa %s28, 0
    %30 = vsyncpa [#allocation19], 0
    %s31 = scalar_lea.sflag [#allocation19], 1
    %32 = vsyncpa %s31, 0
    loop: start=0, step=1, limit=4
    $region2: #{mha_bow_forward.1} parent=1 // loop_pre_header
      _
    $region3: #{mha_bow_forward.1} parent=1 // loop_header
      %s34 = sphi 0, %s38
      %p35 = scmp.ge.s32.totalorder %s34, 4
      %s44 = sphi 0, %s46
      %s47 = sphi 0, %s44
      %s48 = sphi 0, %s47
      %s64 = sphi 0, %s48
      %s70 = sphi 0, %s72
      %s73 = sphi 0, %s70
      %s74 = sphi 0, %s73
      %s90 = sphi 0, %s74
      %s96 = sphi 0, %s98
      %s99 = sphi 0, %s96
      %s100 = sphi 0, %s99
      %s116 = sphi 0, %s100
      %s120 = sphi 0, %s120
      %s122 = sphi 0, %s120
      %s123 = sphi 0, %s122
      %s137 = sphi 0, %s123
      %s141 = sphi 0, %s141
      %s143 = sphi 0, %s141
      %s144 = sphi 0, %s143
      %s158 = sphi 0, %s144
      %s162 = sphi 0, %s162
      %s164 = sphi 0, %s162
      %s165 = sphi 0, %s164
      %s179 = sphi 0, %s165
      %s183 = sphi 0, %s183
      %s185 = sphi 0, %s183
      %s186 = sphi 0, %s185
      %s200 = sphi 0, %s186
      %s204 = sphi 0, %s204
      %s206 = sphi 0, %s204
      %s207 = sphi 0, %s206
      %s221 = sphi 0, %s207
      %s225 = sphi 0, %s225
      %s227 = sphi 0, %s225
      %s228 = sphi 0, %s227
      %s242 = sphi 0, %s228
      %s246 = sphi 0, %s246
      %s248 = sphi 0, %s246
      %s249 = sphi 0, %s248
      %s263 = sphi 0, %s249
      %s267 = sphi 0, %s267
      %s269 = sphi 0, %s267
      %s270 = sphi 0, %s269
      %s284 = sphi 0, %s270
      %s288 = sphi 0, %s288
      %s290 = sphi 0, %s288
      %s291 = sphi 0, %s290
      %s305 = sphi 0, %s291
      %s309 = sphi 0, %s309
      %s311 = sphi 0, %s309
      %s312 = sphi 0, %s311
      %s326 = sphi 0, %s312
      %s332 = sphi 0, %s334
      %s335 = sphi 0, %s332
      %s336 = sphi 0, %s335
      %s352 = sphi 0, %s336
      %s358 = sphi 0, %s360
      %s361 = sphi 0, %s358
      %s362 = sphi 0, %s361
      %s378 = sphi 0, %s362
    $region4: #{mha_bow_forward.1} parent=1 // loop_header_branch
      %37 = sbr.rel (%p35) target = $region8
    $region5: #{mha_bow_forward.1} parent=1 // loop_body
      %s39 = ssub.s32 %s34, 1
      %s40 = ssub.s32 %s34, 2
      %s41 = sadd.s32 %s34, 1
      %s42 = ssub.s32 %s34, %s41
      %p43 = scmp.eq.s32.totalorder %s42, 0
      %s45 = sadd.s32 %s44, 1
      %s46 = scalar_select %p43, %s44, %s45
      %p49 = pneg %p43
      %p50 = scmp.eq.s32.totalorder %s34, 1
      %p51 = por %p49, %p50
      %p52 = scmp.ne.s32.totalorder %s44, %s47
      %p53 = scmp.eq.s32.totalorder %s34, 0
      %p54 = por %p52, %p53
      %p55 = scmp.ne.s32.totalorder %s44, %s47
      %p56 = scmp.eq.s32.totalorder %s39, 1
      %p57 = por %p55, %p56
      %p58 = scmp.ne.s32.totalorder %s47, %s48
      %p59 = scmp.eq.s32.totalorder %s39, 0
      %p60 = por %p58, %p59
      %p61 = scmp.ne.s32.totalorder %s47, %s48
      %p62 = scmp.eq.s32.totalorder %s40, 1
      %p63 = por %p61, %p62
      %p65 = scmp.ne.s32.totalorder %s48, %s64
      %p66 = scmp.eq.s32.totalorder %s40, 0
      %p67 = por %p65, %p66
      %s68 = ssub.s32 %s34, %s41
      %p69 = scmp.eq.s32.totalorder %s68, 0
      %s71 = sadd.s32 %s70, 1
      %s72 = scalar_select %p69, %s70, %s71
      %p75 = pneg %p69
      %p76 = scmp.eq.s32.totalorder %s34, 1
      %p77 = por %p75, %p76
      %p78 = scmp.ne.s32.totalorder %s70, %s73
      %p79 = scmp.eq.s32.totalorder %s34, 0
      %p80 = por %p78, %p79
      %p81 = scmp.ne.s32.totalorder %s70, %s73
      %p82 = scmp.eq.s32.totalorder %s39, 1
      %p83 = por %p81, %p82
      %p84 = scmp.ne.s32.totalorder %s73, %s74
      %p85 = scmp.eq.s32.totalorder %s39, 0
      %p86 = por %p84, %p85
      %p87 = scmp.ne.s32.totalorder %s73, %s74
      %p88 = scmp.eq.s32.totalorder %s40, 1
      %p89 = por %p87, %p88
      %p91 = scmp.ne.s32.totalorder %s74, %s90
      %p92 = scmp.eq.s32.totalorder %s40, 0
      %p93 = por %p91, %p92
      %s94 = ssub.s32 %s34, %s41
      %p95 = scmp.eq.s32.totalorder %s94, 0
      %s97 = sadd.s32 %s96, 1
      %s98 = scalar_select %p95, %s96, %s97
      %p101 = pneg %p95
      %p102 = scmp.eq.s32.totalorder %s34, 1
      %p103 = por %p101, %p102
      %p104 = scmp.ne.s32.totalorder %s96, %s99
      %p105 = scmp.eq.s32.totalorder %s34, 0
      %p106 = por %p104, %p105
      %p107 = scmp.ne.s32.totalorder %s96, %s99
      %p108 = scmp.eq.s32.totalorder %s39, 1
      %p109 = por %p107, %p108
      %p110 = scmp.ne.s32.totalorder %s99, %s100
      %p111 = scmp.eq.s32.totalorder %s39, 0
      %p112 = por %p110, %p111
      %p113 = scmp.ne.s32.totalorder %s99, %s100
      %p114 = scmp.eq.s32.totalorder %s40, 1
      %p115 = por %p113, %p114
      %p117 = scmp.ne.s32.totalorder %s100, %s116
      %p118 = scmp.eq.s32.totalorder %s40, 0
      %p119 = por %p117, %p118
      %s121 = sadd.s32 %s120, 1
      %p124 = scmp.eq.s32.totalorder %s34, 1
      %p125 = scmp.ne.s32.totalorder %s120, %s122
      %p126 = scmp.eq.s32.totalorder %s34, 0
      %p127 = por %p125, %p126
      %p128 = scmp.ne.s32.totalorder %s120, %s122
      %p129 = scmp.eq.s32.totalorder %s39, 1
      %p130 = por %p128, %p129
      %p131 = scmp.ne.s32.totalorder %s122, %s123
      %p132 = scmp.eq.s32.totalorder %s39, 0
      %p133 = por %p131, %p132
      %p134 = scmp.ne.s32.totalorder %s122, %s123
      %p135 = scmp.eq.s32.totalorder %s40, 1
      %p136 = por %p134, %p135
      %p138 = scmp.ne.s32.totalorder %s123, %s137
      %p139 = scmp.eq.s32.totalorder %s40, 0
      %p140 = por %p138, %p139
      %s142 = sadd.s32 %s141, 1
      %p145 = scmp.eq.s32.totalorder %s34, 1
      %p146 = scmp.ne.s32.totalorder %s141, %s143
      %p147 = scmp.eq.s32.totalorder %s34, 0
      %p148 = por %p146, %p147
      %p149 = scmp.ne.s32.totalorder %s141, %s143
      %p150 = scmp.eq.s32.totalorder %s39, 1
      %p151 = por %p149, %p150
      %p152 = scmp.ne.s32.totalorder %s143, %s144
      %p153 = scmp.eq.s32.totalorder %s39, 0
      %p154 = por %p152, %p153
      %p155 = scmp.ne.s32.totalorder %s143, %s144
      %p156 = scmp.eq.s32.totalorder %s40, 1
      %p157 = por %p155, %p156
      %p159 = scmp.ne.s32.totalorder %s144, %s158
      %p160 = scmp.eq.s32.totalorder %s40, 0
      %p161 = por %p159, %p160
      %s163 = sadd.s32 %s162, 1
      %p166 = scmp.eq.s32.totalorder %s34, 1
      %p167 = scmp.ne.s32.totalorder %s162, %s164
      %p168 = scmp.eq.s32.totalorder %s34, 0
      %p169 = por %p167, %p168
      %p170 = scmp.ne.s32.totalorder %s162, %s164
      %p171 = scmp.eq.s32.totalorder %s39, 1
      %p172 = por %p170, %p171
      %p173 = scmp.ne.s32.totalorder %s164, %s165
      %p174 = scmp.eq.s32.totalorder %s39, 0
      %p175 = por %p173, %p174
      %p176 = scmp.ne.s32.totalorder %s164, %s165
      %p177 = scmp.eq.s32.totalorder %s40, 1
      %p178 = por %p176, %p177
      %p180 = scmp.ne.s32.totalorder %s165, %s179
      %p181 = scmp.eq.s32.totalorder %s40, 0
      %p182 = por %p180, %p181
      %s184 = sadd.s32 %s183, 1
      %p187 = scmp.eq.s32.totalorder %s34, 1
      %p188 = scmp.ne.s32.totalorder %s183, %s185
      %p189 = scmp.eq.s32.totalorder %s34, 0
      %p190 = por %p188, %p189
      %p191 = scmp.ne.s32.totalorder %s183, %s185
      %p192 = scmp.eq.s32.totalorder %s39, 1
      %p193 = por %p191, %p192
      %p194 = scmp.ne.s32.totalorder %s185, %s186
      %p195 = scmp.eq.s32.totalorder %s39, 0
      %p196 = por %p194, %p195
      %p197 = scmp.ne.s32.totalorder %s185, %s186
      %p198 = scmp.eq.s32.totalorder %s40, 1
      %p199 = por %p197, %p198
      %p201 = scmp.ne.s32.totalorder %s186, %s200
      %p202 = scmp.eq.s32.totalorder %s40, 0
      %p203 = por %p201, %p202
      %s205 = sadd.s32 %s204, 1
      %p208 = scmp.eq.s32.totalorder %s34, 1
      %p209 = scmp.ne.s32.totalorder %s204, %s206
      %p210 = scmp.eq.s32.totalorder %s34, 0
      %p211 = por %p209, %p210
      %p212 = scmp.ne.s32.totalorder %s204, %s206
      %p213 = scmp.eq.s32.totalorder %s39, 1
      %p214 = por %p212, %p213
      %p215 = scmp.ne.s32.totalorder %s206, %s207
      %p216 = scmp.eq.s32.totalorder %s39, 0
      %p217 = por %p215, %p216
      %p218 = scmp.ne.s32.totalorder %s206, %s207
      %p219 = scmp.eq.s32.totalorder %s40, 1
      %p220 = por %p218, %p219
      %p222 = scmp.ne.s32.totalorder %s207, %s221
      %p223 = scmp.eq.s32.totalorder %s40, 0
      %p224 = por %p222, %p223
      %s226 = sadd.s32 %s225, 1
      %p229 = scmp.eq.s32.totalorder %s34, 1
      %p230 = scmp.ne.s32.totalorder %s225, %s227
      %p231 = scmp.eq.s32.totalorder %s34, 0
      %p232 = por %p230, %p231
      %p233 = scmp.ne.s32.totalorder %s225, %s227
      %p234 = scmp.eq.s32.totalorder %s39, 1
      %p235 = por %p233, %p234
      %p236 = scmp.ne.s32.totalorder %s227, %s228
      %p237 = scmp.eq.s32.totalorder %s39, 0
      %p238 = por %p236, %p237
      %p239 = scmp.ne.s32.totalorder %s227, %s228
      %p240 = scmp.eq.s32.totalorder %s40, 1
      %p241 = por %p239, %p240
      %p243 = scmp.ne.s32.totalorder %s228, %s242
      %p244 = scmp.eq.s32.totalorder %s40, 0
      %p245 = por %p243, %p244
      %s247 = sadd.s32 %s246, 1
      %p250 = scmp.eq.s32.totalorder %s34, 1
      %p251 = scmp.ne.s32.totalorder %s246, %s248
      %p252 = scmp.eq.s32.totalorder %s34, 0
      %p253 = por %p251, %p252
      %p254 = scmp.ne.s32.totalorder %s246, %s248
      %p255 = scmp.eq.s32.totalorder %s39, 1
      %p256 = por %p254, %p255
      %p257 = scmp.ne.s32.totalorder %s248, %s249
      %p258 = scmp.eq.s32.totalorder %s39, 0
      %p259 = por %p257, %p258
      %p260 = scmp.ne.s32.totalorder %s248, %s249
      %p261 = scmp.eq.s32.totalorder %s40, 1
      %p262 = por %p260, %p261
      %p264 = scmp.ne.s32.totalorder %s249, %s263
      %p265 = scmp.eq.s32.totalorder %s40, 0
      %p266 = por %p264, %p265
      %s268 = sadd.s32 %s267, 1
      %p271 = scmp.eq.s32.totalorder %s34, 1
      %p272 = scmp.ne.s32.totalorder %s267, %s269
      %p273 = scmp.eq.s32.totalorder %s34, 0
      %p274 = por %p272, %p273
      %p275 = scmp.ne.s32.totalorder %s267, %s269
      %p276 = scmp.eq.s32.totalorder %s39, 1
      %p277 = por %p275, %p276
      %p278 = scmp.ne.s32.totalorder %s269, %s270
      %p279 = scmp.eq.s32.totalorder %s39, 0
      %p280 = por %p278, %p279
      %p281 = scmp.ne.s32.totalorder %s269, %s270
      %p282 = scmp.eq.s32.totalorder %s40, 1
      %p283 = por %p281, %p282
      %p285 = scmp.ne.s32.totalorder %s270, %s284
      %p286 = scmp.eq.s32.totalorder %s40, 0
      %p287 = por %p285, %p286
      %s289 = sadd.s32 %s288, 1
      %p292 = scmp.eq.s32.totalorder %s34, 1
      %p293 = scmp.ne.s32.totalorder %s288, %s290
      %p294 = scmp.eq.s32.totalorder %s34, 0
      %p295 = por %p293, %p294
      %p296 = scmp.ne.s32.totalorder %s288, %s290
      %p297 = scmp.eq.s32.totalorder %s39, 1
      %p298 = por %p296, %p297
      %p299 = scmp.ne.s32.totalorder %s290, %s291
      %p300 = scmp.eq.s32.totalorder %s39, 0
      %p301 = por %p299, %p300
      %p302 = scmp.ne.s32.totalorder %s290, %s291
      %p303 = scmp.eq.s32.totalorder %s40, 1
      %p304 = por %p302, %p303
      %p306 = scmp.ne.s32.totalorder %s291, %s305
      %p307 = scmp.eq.s32.totalorder %s40, 0
      %p308 = por %p306, %p307
      %s310 = sadd.s32 %s309, 1
      %p313 = scmp.eq.s32.totalorder %s34, 1
      %p314 = scmp.ne.s32.totalorder %s309, %s311
      %p315 = scmp.eq.s32.totalorder %s34, 0
      %p316 = por %p314, %p315
      %p317 = scmp.ne.s32.totalorder %s309, %s311
      %p318 = scmp.eq.s32.totalorder %s39, 1
      %p319 = por %p317, %p318
      %p320 = scmp.ne.s32.totalorder %s311, %s312
      %p321 = scmp.eq.s32.totalorder %s39, 0
      %p322 = por %p320, %p321
      %p323 = scmp.ne.s32.totalorder %s311, %s312
      %p324 = scmp.eq.s32.totalorder %s40, 1
      %p325 = por %p323, %p324
      %p327 = scmp.ne.s32.totalorder %s312, %s326
      %p328 = scmp.eq.s32.totalorder %s40, 0
      %p329 = por %p327, %p328
      %s330 = ssub.s32 %s34, %s41
      %p331 = scmp.eq.s32.totalorder %s330, 0
      %s333 = sadd.s32 %s332, 1
      %s334 = scalar_select %p331, %s332, %s333
      %p337 = pneg %p331
      %p338 = scmp.eq.s32.totalorder %s34, 1
      %p339 = por %p337, %p338
      %p340 = scmp.ne.s32.totalorder %s332, %s335
      %p341 = scmp.eq.s32.totalorder %s34, 0
      %p342 = por %p340, %p341
      %p343 = scmp.ne.s32.totalorder %s332, %s335
      %p344 = scmp.eq.s32.totalorder %s39, 1
      %p345 = por %p343, %p344
      %p346 = scmp.ne.s32.totalorder %s335, %s336
      %p347 = scmp.eq.s32.totalorder %s39, 0
      %p348 = por %p346, %p347
      %p349 = scmp.ne.s32.totalorder %s335, %s336
      %p350 = scmp.eq.s32.totalorder %s40, 1
      %p351 = por %p349, %p350
      %p353 = scmp.ne.s32.totalorder %s336, %s352
      %p354 = scmp.eq.s32.totalorder %s40, 0
      %p355 = por %p353, %p354
      %s356 = ssub.s32 %s34, %s41
      %p357 = scmp.eq.s32.totalorder %s356, 0
      %s359 = sadd.s32 %s358, 1
      %s360 = scalar_select %p357, %s358, %s359
      %p363 = pneg %p357
      %p364 = scmp.eq.s32.totalorder %s34, 1
      %p365 = por %p363, %p364
      %p366 = scmp.ne.s32.totalorder %s358, %s361
      %p367 = scmp.eq.s32.totalorder %s34, 0
      %p368 = por %p366, %p367
      %p369 = scmp.ne.s32.totalorder %s358, %s361
      %p370 = scmp.eq.s32.totalorder %s39, 1
      %p371 = por %p369, %p370
      %p372 = scmp.ne.s32.totalorder %s361, %s362
      %p373 = scmp.eq.s32.totalorder %s39, 0
      %p374 = por %p372, %p373
      %p375 = scmp.ne.s32.totalorder %s361, %s362
      %p376 = scmp.eq.s32.totalorder %s40, 1
      %p377 = por %p375, %p376
      %p379 = scmp.ne.s32.totalorder %s362, %s378
      %p380 = scmp.eq.s32.totalorder %s40, 0
      %p381 = por %p379, %p380
      %p382 = scmp.le.s32.totalorder 1, %s34
      %p383 = scmp.lt.s32.totalorder %s34, 3
      %p384 = pnand %p382, %p383
      %p385 = pneg %p384
      // Predicated region
      $region9: #{mha_bow_forward.1} parent=5 // pred_check
        _
      $region10: #{mha_bow_forward.1} parent=5 // pred_check_branch
        %387 = sbr.rel (%p384) target = $region12
      $region11: #{mha_bow_forward.1} parent=5 // pred_region
        %s388 = ssub.s32 %s34, 1
        // Predicated region
        $region13: #{mha_bow_forward.1} parent=11 // pred_check
          %p389 = pneg %p133
        $region14: #{mha_bow_forward.1} parent=11 // pred_check_branch
          %391 = sbr.rel (%p389) target = $region16
        $region15: #{mha_bow_forward.1} parent=11 // pred_region
          %s393 = ssub.s32 2048, 2048
          %394 = vsyncadd [#allocation6], %s393
          %s395 = sshll.u32 [#allocation5], 4
          %s396 = int_to_ptr.vmem [resolvable:$true] %s395
          %401 = dma.hbm_to_vmem [thread:$0]  %s3, 2048, %s396, [#allocation6], 128, 128, 8
        $region16: #{mha_bow_forward.1} parent=11 // pred_fallthru
          _
        // Predicated region
        $region17: #{mha_bow_forward.1} parent=11 // pred_check
          %p402 = pneg %p154
        $region18: #{mha_bow_forward.1} parent=11 // pred_check_branch
          %404 = sbr.rel (%p402) target = $region20
        $region19: #{mha_bow_forward.1} parent=11 // pred_region
          _
        $region20: #{mha_bow_forward.1} parent=11 // pred_fallthru
          _
        // Predicated region
        $region21: #{mha_bow_forward.1} parent=11 // pred_check
          %p405 = pneg %p175
        $region22: #{mha_bow_forward.1} parent=11 // pred_check_branch
          %407 = sbr.rel (%p405) target = $region24
        $region23: #{mha_bow_forward.1} parent=11 // pred_region
          %s409 = ssub.s32 2048, 2048
          %410 = vsyncadd [#allocation6], %s409
          %s411 = sshll.u32 [#allocation7], 4
          %s412 = int_to_ptr.vmem [resolvable:$true] %s411
          %417 = dma.hbm_to_vmem [thread:$0]  %s5, 2048, %s412, [#allocation6], 128, 128, 8
        $region24: #{mha_bow_forward.1} parent=11 // pred_fallthru
          _
        // Predicated region
        $region25: #{mha_bow_forward.1} parent=11 // pred_check
          %p418 = pneg %p196
        $region26: #{mha_bow_forward.1} parent=11 // pred_check_branch
          %420 = sbr.rel (%p418) target = $region28
        $region27: #{mha_bow_forward.1} parent=11 // pred_region
          _
        $region28: #{mha_bow_forward.1} parent=11 // pred_fallthru
          _
        // Predicated region
        $region29: #{mha_bow_forward.1} parent=11 // pred_check
          %p421 = pneg %p217
        $region30: #{mha_bow_forward.1} parent=11 // pred_check_branch
          %423 = sbr.rel (%p421) target = $region32
        $region31: #{mha_bow_forward.1} parent=11 // pred_region
          %s425 = ssub.s32 2048, 2048
          %426 = vsyncadd [#allocation9], %s425
          %s427 = sshll.u32 [#allocation8], 4
          %s428 = int_to_ptr.vmem [resolvable:$true] %s427
          %433 = dma.hbm_to_vmem [thread:$0]  %s7, 2048, %s428, [#allocation9], 128, 128, 8
        $region32: #{mha_bow_forward.1} parent=11 // pred_fallthru
          _
        // Predicated region
        $region33: #{mha_bow_forward.1} parent=11 // pred_check
          %p434 = pneg %p238
        $region34: #{mha_bow_forward.1} parent=11 // pred_check_branch
          %436 = sbr.rel (%p434) target = $region36
        $region35: #{mha_bow_forward.1} parent=11 // pred_region
          %s438 = ssub.s32 16, 16
          %439 = vsyncadd [#allocation9], %s438
          %s441 = sshll.u32 [#allocation10], 4
          %s442 = int_to_ptr.vmem [resolvable:$true] %s441
          %444 = dma.hbm_to_vmem [thread:$0]  %s8, 16, %s442, [#allocation9]
        $region36: #{mha_bow_forward.1} parent=11 // pred_fallthru
          _
        // Predicated region
        $region37: #{mha_bow_forward.1} parent=11 // pred_check
          %p445 = pneg %p259
        $region38: #{mha_bow_forward.1} parent=11 // pred_check_branch
          %447 = sbr.rel (%p445) target = $region40
        $region39: #{mha_bow_forward.1} parent=11 // pred_region
          %s449 = ssub.s32 2048, 2048
          %450 = vsyncadd [#allocation12], %s449
          %s451 = sshll.u32 [#allocation11], 4
          %s452 = int_to_ptr.vmem [resolvable:$true] %s451
          %457 = dma.hbm_to_vmem [thread:$0]  %s9, 2048, %s452, [#allocation12], 128, 128, 8
        $region40: #{mha_bow_forward.1} parent=11 // pred_fallthru
          _
        // Predicated region
        $region41: #{mha_bow_forward.1} parent=11 // pred_check
          %p458 = pneg %p280
        $region42: #{mha_bow_forward.1} parent=11 // pred_check_branch
          %460 = sbr.rel (%p458) target = $region44
        $region43: #{mha_bow_forward.1} parent=11 // pred_region
          %s462 = ssub.s32 16, 16
          %463 = vsyncadd [#allocation12], %s462
          %s465 = sshll.u32 [#allocation13], 4
          %s466 = int_to_ptr.vmem [resolvable:$true] %s465
          %468 = dma.hbm_to_vmem [thread:$0]  %s10, 16, %s466, [#allocation12]
        $region44: #{mha_bow_forward.1} parent=11 // pred_fallthru
          _
        // Predicated region
        $region45: #{mha_bow_forward.1} parent=11 // pred_check
          %p469 = pneg %p301
        $region46: #{mha_bow_forward.1} parent=11 // pred_check_branch
          %471 = sbr.rel (%p469) target = $region48
        $region47: #{mha_bow_forward.1} parent=11 // pred_region
          %s473 = ssub.s32 16, 16
          %474 = vsyncadd [#allocation15], %s473
          %s476 = sshll.u32 [#allocation14], 4
          %s477 = int_to_ptr.vmem [resolvable:$true] %s476
          %479 = dma.hbm_to_vmem [thread:$0]  %s11, 16, %s477, [#allocation15]
        $region48: #{mha_bow_forward.1} parent=11 // pred_fallthru
          _
        // Predicated region
        $region49: #{mha_bow_forward.1} parent=11 // pred_check
          %p480 = pneg %p322
        $region50: #{mha_bow_forward.1} parent=11 // pred_check_branch
          %482 = sbr.rel (%p480) target = $region52
        $region51: #{mha_bow_forward.1} parent=11 // pred_region
          %s484 = ssub.s32 16, 16
          %485 = vsyncadd [#allocation15], %s484
          %s487 = sshll.u32 [#allocation16], 4
          %s488 = int_to_ptr.vmem [resolvable:$true] %s487
          %490 = dma.hbm_to_vmem [thread:$0]  %s12, 16, %s488, [#allocation15]
        $region52: #{mha_bow_forward.1} parent=11 // pred_fallthru
          _
      $region12: #{mha_bow_forward.1} parent=5 // pred_fallthru
        _
      %p491 = scmp.lt.s32.totalorder %s34, 2
      // Predicated region
      $region53: #{mha_bow_forward.1} parent=5 // pred_check
        %p492 = pneg %p491
      $region54: #{mha_bow_forward.1} parent=5 // pred_check_branch
        %494 = sbr.rel (%p492) target = $region56
      $region55: #{mha_bow_forward.1} parent=5 // pred_region
        // Predicated region
        $region57: #{mha_bow_forward.1} parent=55 // pred_check
          %p495 = pneg %p54
        $region58: #{mha_bow_forward.1} parent=55 // pred_check_branch
          %497 = sbr.rel (%p495) target = $region60
        $region59: #{mha_bow_forward.1} parent=55 // pred_region
          %p498 = scmp.lt.s32.totalorder %s34, 1
          %s499 = scalar_select %p498, %s34, 1
          %s500 = smul.addr %s499, 8
          %s501 = scalar_lea.vmem %s0, %s500
        $region60: #{mha_bow_forward.1} parent=55 // pred_fallthru
          _
        // Predicated region
        $region61: #{mha_bow_forward.1} parent=55 // pred_check
          %p502 = pneg %p80
        $region62: #{mha_bow_forward.1} parent=55 // pred_check_branch
          %504 = sbr.rel (%p502) target = $region64
        $region63: #{mha_bow_forward.1} parent=55 // pred_region
          %p505 = scmp.lt.s32.totalorder %s34, 1
          %s506 = scalar_select %p505, %s34, 1
          %s507 = smul.addr %s506, 8
          %s508 = scalar_lea.vmem %s1, %s507
        $region64: #{mha_bow_forward.1} parent=55 // pred_fallthru
          _
        // Predicated region
        $region65: #{mha_bow_forward.1} parent=55 // pred_check
          %p509 = pneg %p106
        $region66: #{mha_bow_forward.1} parent=55 // pred_check_branch
          %511 = sbr.rel (%p509) target = $region68
        $region67: #{mha_bow_forward.1} parent=55 // pred_region
          %s512 = sand.u32 %s96, 1
          %s513 = scalar_lea.sflag [#allocation3], %s512
          %s514 = sand.u32 %s96, 1
          %s515 = smul.addr %s514, 8
          %s516 = scalar_lea.vmem [#allocation2], %s515
          %s518 = ssub.s32 128, 128
          %519 = vsyncadd %s513, %s518
          %s520 = smul.addr %s34, 128
          %s521 = scalar_lea.hbm %s2, %s520
          %s523 = sshll.u32 %s516, 4
          %s524 = int_to_ptr.vmem [resolvable:$true] %s523
          %526 = dma.hbm_to_vmem [thread:$0]  %s521, 128, %s524, %s513
        $region68: #{mha_bow_forward.1} parent=55 // pred_fallthru
          _
      $region56: #{mha_bow_forward.1} parent=5 // pred_fallthru
        _
      %p527 = scmp.le.s32.totalorder 1, %s34
      %p528 = scmp.lt.s32.totalorder %s34, 3
      %p529 = pnand %p527, %p528
      %p530 = pneg %p529
      // Predicated region
      $region69: #{mha_bow_forward.1} parent=5 // pred_check
        _
      $region70: #{mha_bow_forward.1} parent=5 // pred_check_branch
        %532 = sbr.rel (%p529) target = $region72
      $region71: #{mha_bow_forward.1} parent=5 // pred_region
        %s533 = ssub.s32 %s34, 1
        %s534 = sand.u32 %s99, 1
        %s535 = scalar_lea.sflag [#allocation3], %s534
        %s536 = sand.u32 %s99, 1
        %s537 = smul.addr %s536, 8
        %s538 = scalar_lea.vmem [#allocation2], %s537
        // Predicated region
        $region73: #{mha_bow_forward.1} parent=71 // pred_check
          %p539 = pneg %p112
        $region74: #{mha_bow_forward.1} parent=71 // pred_check_branch
          %541 = sbr.rel (%p539) target = $region76
        $region75: #{mha_bow_forward.1} parent=71 // pred_region
          %542 = dma.done %s535, 128
        $region76: #{mha_bow_forward.1} parent=71 // pred_fallthru
          _
        // Predicated region
        $region77: #{mha_bow_forward.1} parent=71 // pred_check
          %p543 = pneg %p133
        $region78: #{mha_bow_forward.1} parent=71 // pred_check_branch
          %545 = sbr.rel (%p543) target = $region80
        $region79: #{mha_bow_forward.1} parent=71 // pred_region
          %546 = dma.done [#allocation6], 2048
        $region80: #{mha_bow_forward.1} parent=71 // pred_fallthru
          _
        // Predicated region
        $region81: #{mha_bow_forward.1} parent=71 // pred_check
          %p547 = pneg %p175
        $region82: #{mha_bow_forward.1} parent=71 // pred_check_branch
          %549 = sbr.rel (%p547) target = $region84
        $region83: #{mha_bow_forward.1} parent=71 // pred_region
          %550 = dma.done [#allocation6], 2048
        $region84: #{mha_bow_forward.1} parent=71 // pred_fallthru
          _
        // Predicated region
        $region85: #{mha_bow_forward.1} parent=71 // pred_check
          %p551 = pneg %p217
        $region86: #{mha_bow_forward.1} parent=71 // pred_check_branch
          %553 = sbr.rel (%p551) target = $region88
        $region87: #{mha_bow_forward.1} parent=71 // pred_region
          %554 = dma.done [#allocation9], 2048
        $region88: #{mha_bow_forward.1} parent=71 // pred_fallthru
          _
        // Predicated region
        $region89: #{mha_bow_forward.1} parent=71 // pred_check
          %p555 = pneg %p238
        $region90: #{mha_bow_forward.1} parent=71 // pred_check_branch
          %557 = sbr.rel (%p555) target = $region92
        $region91: #{mha_bow_forward.1} parent=71 // pred_region
          %558 = dma.done [#allocation9], 16
        $region92: #{mha_bow_forward.1} parent=71 // pred_fallthru
          _
        // Predicated region
        $region93: #{mha_bow_forward.1} parent=71 // pred_check
          %p559 = pneg %p259
        $region94: #{mha_bow_forward.1} parent=71 // pred_check_branch
          %561 = sbr.rel (%p559) target = $region96
        $region95: #{mha_bow_forward.1} parent=71 // pred_region
          %562 = dma.done [#allocation12], 2048
        $region96: #{mha_bow_forward.1} parent=71 // pred_fallthru
          _
        // Predicated region
        $region97: #{mha_bow_forward.1} parent=71 // pred_check
          %p563 = pneg %p280
        $region98: #{mha_bow_forward.1} parent=71 // pred_check_branch
          %565 = sbr.rel (%p563) target = $region100
        $region99: #{mha_bow_forward.1} parent=71 // pred_region
          %566 = dma.done [#allocation12], 16
        $region100: #{mha_bow_forward.1} parent=71 // pred_fallthru
          _
        // Predicated region
        $region101: #{mha_bow_forward.1} parent=71 // pred_check
          %p567 = pneg %p301
        $region102: #{mha_bow_forward.1} parent=71 // pred_check_branch
          %569 = sbr.rel (%p567) target = $region104
        $region103: #{mha_bow_forward.1} parent=71 // pred_region
          %570 = dma.done [#allocation15], 16
        $region104: #{mha_bow_forward.1} parent=71 // pred_fallthru
          _
        // Predicated region
        $region105: #{mha_bow_forward.1} parent=71 // pred_check
          %p571 = pneg %p322
        $region106: #{mha_bow_forward.1} parent=71 // pred_check_branch
          %573 = sbr.rel (%p571) target = $region108
        $region107: #{mha_bow_forward.1} parent=71 // pred_region
          %574 = dma.done [#allocation15], 16
        $region108: #{mha_bow_forward.1} parent=71 // pred_fallthru
          _
        %p575 = scmp.lt.s32.totalorder %s39, 1
        %s576 = scalar_select %p575, %s39, 1
        %s577 = smul.addr %s576, 8
        %s578 = scalar_lea.vmem %s0, %s577
        %p579 = pneg %p60
        %p580 = pneg %p57
        %p581 = scmp.lt.s32.totalorder %s39, 1
        %s582 = scalar_select %p581, %s39, 1
        %s583 = smul.addr %s582, 8
        %s584 = scalar_lea.vmem %s1, %s583
        %p585 = pneg %p86
        %p586 = pneg %p83
        %s587 = sand.u32 %s99, 1
        %s588 = scalar_lea.sflag [#allocation3], %s587
        %s589 = sand.u32 %s99, 1
        %s590 = smul.addr %s589, 8
        %s591 = scalar_lea.vmem [#allocation2], %s590
        %p592 = pneg %p112
        %p593 = pneg %p109
        %p594 = pneg %p133
        %p595 = pneg %p130
        %p596 = pneg %p154
        %p597 = pneg %p151
        %p598 = pneg %p175
        %p599 = pneg %p172
        %p600 = pneg %p196
        %p601 = pneg %p193
        %p602 = pneg %p217
        %p603 = pneg %p214
        %p604 = pneg %p238
        %p605 = pneg %p235
        %p606 = pneg %p259
        %p607 = pneg %p256
        %p608 = pneg %p280
        %p609 = pneg %p277
        %p610 = pneg %p301
        %p611 = pneg %p298
        %p612 = pneg %p322
        %p613 = pneg %p319
        %p614 = pneg %p348
        %p615 = pneg %p345
        %s616 = sand.u32 %s335, 1
        %s617 = scalar_lea.sflag [#allocation4], %s616
        %s618 = sand.u32 %s335, 1
        %s619 = smul.addr %s618, 8
        %s620 = scalar_lea.vmem [#allocation17], %s619
        %p621 = pneg %p374
        %p622 = pneg %p371
        %s623 = sand.u32 %s361, 1
        %s624 = scalar_lea.sflag [#allocation19], %s623
        %s625 = sand.u32 %s361, 1
        %s626 = smul.addr %s625, 32
        %s627 = scalar_lea.vmem [#allocation18], %s626
        %p628 = scmp.lt.s32.totalorder %s39, 1
        %s629 = scalar_select %p628, %s39, 1
        %s630 = smul.addr %s629, 8
        %s631 = scalar_lea.vmem %s0, %s630
        %p632 = scmp.lt.s32.totalorder %s39, 1
        %s633 = scalar_select %p632, %s39, 1
        %s634 = smul.addr %s633, 8
        %s635 = scalar_lea.vmem %s1, %s634
        %v636 = vld [vmem:[%s631] sm:$0xff]
        %v637 = vld [vmem:[%s635] sm:$0xff]
        %v638 = vld [vmem:[%s538] sm:$0xff]
        %v639 = vld [vmem:[#allocation5] sm:$0xff]
        %v640 = vld [vmem:[#allocation5 + $0x8] sm:$0xff]
        %v641 = vld [vmem:[#allocation5 + $0x10] sm:$0xff]
        %v642 = vld [vmem:[#allocation5 + $0x18] sm:$0xff]
        %v643 = vld [vmem:[#allocation5 + $0x20] sm:$0xff]
        %v644 = vld [vmem:[#allocation5 + $0x28] sm:$0xff]
        %v645 = vld [vmem:[#allocation5 + $0x30] sm:$0xff]
        %v646 = vld [vmem:[#allocation5 + $0x38] sm:$0xff]
        %v647 = vld [vmem:[#allocation5 + $0x40] sm:$0xff]
        %v648 = vld [vmem:[#allocation5 + $0x48] sm:$0xff]
        %v649 = vld [vmem:[#allocation5 + $0x50] sm:$0xff]
        %v650 = vld [vmem:[#allocation5 + $0x58] sm:$0xff]
        %v651 = vld [vmem:[#allocation5 + $0x60] sm:$0xff]
        %v652 = vld [vmem:[#allocation5 + $0x68] sm:$0xff]
        %v653 = vld [vmem:[#allocation5 + $0x70] sm:$0xff]
        %v654 = vld [vmem:[#allocation5 + $0x78] sm:$0xff]
        %v655 = vld [vmem:[%s4] sm:$0x1]
        %v657 = vlaneseq
        %v658 = vshrl.u32 %v657, 7
        %v659 = vsub.s32 0, %v658
        %v660 = vrot.slane %v655, %v659
        %662 = vmatprep.subr.mxu0 0.0
        %663 = vmatpush1.msra.mxu0 %v639
        %664 = vmatprep.subr.mxu0 0.0
        %665 = vmatpush1.msra.mxu0 %v640
        %666 = vmatprep.subr.mxu0 0.0
        %667 = vmatpush1.msra.mxu0 %v641
        %668 = vmatprep.subr.mxu0 0.0
        %669 = vmatpush1.msra.mxu0 %v642
        %670 = vmatprep.subr.mxu0 0.0
        %671 = vmatpush1.msra.mxu0 %v643
        %672 = vmatprep.subr.mxu0 0.0
        %673 = vmatpush1.msra.mxu0 %v644
        %674 = vmatprep.subr.mxu0 0.0
        %675 = vmatpush1.msra.mxu0 %v645
        %676 = vmatprep.subr.mxu0 0.0
        %677 = vmatpush1.msra.mxu0 %v646
        %678 = vmatprep.subr.mxu0 0.0
        %679 = vmatpush1.msra.mxu0 %v647
        %680 = vmatprep.subr.mxu0 0.0
        %681 = vmatpush1.msra.mxu0 %v648
        %682 = vmatprep.subr.mxu0 0.0
        %683 = vmatpush1.msra.mxu0 %v649
        %684 = vmatprep.subr.mxu0 0.0
        %685 = vmatpush1.msra.mxu0 %v650
        %686 = vmatprep.subr.mxu0 0.0
        %687 = vmatpush1.msra.mxu0 %v651
        %688 = vmatprep.subr.mxu0 0.0
        %689 = vmatpush1.msra.mxu0 %v652
        %690 = vmatprep.subr.mxu0 0.0
        %691 = vmatpush1.msra.mxu0 %v653
        %692 = vmatprep.subr.mxu0 0.0
        %693 = vmatpush1.msra.mxu0 %v654
        %694 = vmatprep.subr.mxu0 0.0
        %695 = vmatpush1.msra.mxu0 0.0
        %696 = vmatprep.subr.mxu0 0.0
        %697 = vmatpush1.msra.mxu0 0.0
        %698 = vmatprep.subr.mxu0 0.0
        %699 = vmatpush1.msra.mxu0 0.0
        %700 = vmatprep.subr.mxu0 0.0
        %701 = vmatpush1.msra.mxu0 0.0
        %702 = vmatprep.subr.mxu0 0.0
        %703 = vmatpush1.msra.mxu0 0.0
        %704 = vmatprep.subr.mxu0 0.0
        %705 = vmatpush1.msra.mxu0 0.0
        %706 = vmatprep.subr.mxu0 0.0
        %707 = vmatpush1.msra.mxu0 0.0
        %708 = vmatprep.subr.mxu0 0.0
        %709 = vmatpush1.msra.mxu0 0.0
        %710 = vmatprep.subr.mxu0 0.0
        %711 = vmatpush1.msra.mxu0 0.0
        %712 = vmatprep.subr.mxu0 0.0
        %713 = vmatpush1.msra.mxu0 0.0
        %714 = vmatprep.subr.mxu0 0.0
        %715 = vmatpush1.msra.mxu0 0.0
        %716 = vmatprep.subr.mxu0 0.0
        %717 = vmatpush1.msra.mxu0 0.0
        %718 = vmatprep.subr.mxu0 0.0
        %719 = vmatpush1.msra.mxu0 0.0
        %720 = vmatprep.subr.mxu0 0.0
        %721 = vmatpush1.msra.mxu0 0.0
        %722 = vmatprep.subr.mxu0 0.0
        %723 = vmatpush1.msra.mxu0 0.0
        %724 = vmatprep.subr.mxu0 0.0
        %725 = vmatpush1.msra.mxu0 0.0
        %726 = vmatprep.mubr.f32.mxu0 0.0
        %727 = vmatmul.mubr.f32.gmra.mrb[0].mxu0 %v636
        %v728 = vpop.f32.mrb[0].mxu0
        %v729 = vadd.f32 %v660, %v728
        %v730 = vpop.f32.mrb[0].mxu0
        %731 = vdwg.mxu0
        %v732 = vld [vmem:[#allocation7] sm:$0xff]
        %v733 = vld [vmem:[#allocation7 + $0x8] sm:$0xff]
        %v734 = vld [vmem:[#allocation7 + $0x10] sm:$0xff]
        %v735 = vld [vmem:[#allocation7 + $0x18] sm:$0xff]
        %v736 = vld [vmem:[#allocation7 + $0x20] sm:$0xff]
        %v737 = vld [vmem:[#allocation7 + $0x28] sm:$0xff]
        %v738 = vld [vmem:[#allocation7 + $0x30] sm:$0xff]
        %v739 = vld [vmem:[#allocation7 + $0x38] sm:$0xff]
        %v740 = vld [vmem:[#allocation7 + $0x40] sm:$0xff]
        %v741 = vld [vmem:[#allocation7 + $0x48] sm:$0xff]
        %v742 = vld [vmem:[#allocation7 + $0x50] sm:$0xff]
        %v743 = vld [vmem:[#allocation7 + $0x58] sm:$0xff]
        %v744 = vld [vmem:[#allocation7 + $0x60] sm:$0xff]
        %v745 = vld [vmem:[#allocation7 + $0x68] sm:$0xff]
        %v746 = vld [vmem:[#allocation7 + $0x70] sm:$0xff]
        %v747 = vld [vmem:[#allocation7 + $0x78] sm:$0xff]
        %v748 = vld [vmem:[%s6] sm:$0x1]
        %v750 = vlaneseq
        %v751 = vshrl.u32 %v750, 7
        %v752 = vsub.s32 0, %v751
        %v753 = vrot.slane %v748, %v752
        %755 = vmatprep.subr.mxu0 0.0
        %756 = vmatpush1.msra.mxu0 %v732
        %757 = vmatprep.subr.mxu0 0.0
        %758 = vmatpush1.msra.mxu0 %v733
        %759 = vmatprep.subr.mxu0 0.0
        %760 = vmatpush1.msra.mxu0 %v734
        %761 = vmatprep.subr.mxu0 0.0
        %762 = vmatpush1.msra.mxu0 %v735
        %763 = vmatprep.subr.mxu0 0.0
        %764 = vmatpush1.msra.mxu0 %v736
        %765 = vmatprep.subr.mxu0 0.0
        %766 = vmatpush1.msra.mxu0 %v737
        %767 = vmatprep.subr.mxu0 0.0
        %768 = vmatpush1.msra.mxu0 %v738
        %769 = vmatprep.subr.mxu0 0.0
        %770 = vmatpush1.msra.mxu0 %v739
        %771 = vmatprep.subr.mxu0 0.0
        %772 = vmatpush1.msra.mxu0 %v740
        %773 = vmatprep.subr.mxu0 0.0
        %774 = vmatpush1.msra.mxu0 %v741
        %775 = vmatprep.subr.mxu0 0.0
        %776 = vmatpush1.msra.mxu0 %v742
        %777 = vmatprep.subr.mxu0 0.0
        %778 = vmatpush1.msra.mxu0 %v743
        %779 = vmatprep.subr.mxu0 0.0
        %780 = vmatpush1.msra.mxu0 %v744
        %781 = vmatprep.subr.mxu0 0.0
        %782 = vmatpush1.msra.mxu0 %v745
        %783 = vmatprep.subr.mxu0 0.0
        %784 = vmatpush1.msra.mxu0 %v746
        %785 = vmatprep.subr.mxu0 0.0
        %786 = vmatpush1.msra.mxu0 %v747
        %787 = vmatprep.subr.mxu0 0.0
        %788 = vmatpush1.msra.mxu0 0.0
        %789 = vmatprep.subr.mxu0 0.0
        %790 = vmatpush1.msra.mxu0 0.0
        %791 = vmatprep.subr.mxu0 0.0
        %792 = vmatpush1.msra.mxu0 0.0
        %793 = vmatprep.subr.mxu0 0.0
        %794 = vmatpush1.msra.mxu0 0.0
        %795 = vmatprep.subr.mxu0 0.0
        %796 = vmatpush1.msra.mxu0 0.0
        %797 = vmatprep.subr.mxu0 0.0
        %798 = vmatpush1.msra.mxu0 0.0
        %799 = vmatprep.subr.mxu0 0.0
        %800 = vmatpush1.msra.mxu0 0.0
        %801 = vmatprep.subr.mxu0 0.0
        %802 = vmatpush1.msra.mxu0 0.0
        %803 = vmatprep.subr.mxu0 0.0
        %804 = vmatpush1.msra.mxu0 0.0
        %805 = vmatprep.subr.mxu0 0.0
        %806 = vmatpush1.msra.mxu0 0.0
        %807 = vmatprep.subr.mxu0 0.0
        %808 = vmatpush1.msra.mxu0 0.0
        %809 = vmatprep.subr.mxu0 0.0
        %810 = vmatpush1.msra.mxu0 0.0
        %811 = vmatprep.subr.mxu0 0.0
        %812 = vmatpush1.msra.mxu0 0.0
        %813 = vmatprep.subr.mxu0 0.0
        %814 = vmatpush1.msra.mxu0 0.0
        %815 = vmatprep.subr.mxu0 0.0
        %816 = vmatpush1.msra.mxu0 0.0
        %817 = vmatprep.subr.mxu0 0.0
        %818 = vmatpush1.msra.mxu0 0.0
        %819 = vmatprep.mubr.f32.mxu0 0.0
        %820 = vmatmul.mubr.f32.gmra.mrb[0].mxu0 %v637
        %v821 = vpop.f32.mrb[0].mxu0
        %v822 = vadd.f32 %v753, %v821
        %v823 = vpop.f32.mrb[0].mxu0
        %824 = vdwg.mxu0
        %v825 = vld [vmem:[#allocation8] sm:$0xff]
        %v826 = vld [vmem:[#allocation8 + $0x8] sm:$0xff]
        %v827 = vld [vmem:[#allocation8 + $0x10] sm:$0xff]
        %v828 = vld [vmem:[#allocation8 + $0x18] sm:$0xff]
        %v829 = vld [vmem:[#allocation8 + $0x20] sm:$0xff]
        %v830 = vld [vmem:[#allocation8 + $0x28] sm:$0xff]
        %v831 = vld [vmem:[#allocation8 + $0x30] sm:$0xff]
        %v832 = vld [vmem:[#allocation8 + $0x38] sm:$0xff]
        %v833 = vld [vmem:[#allocation8 + $0x40] sm:$0xff]
        %v834 = vld [vmem:[#allocation8 + $0x48] sm:$0xff]
        %v835 = vld [vmem:[#allocation8 + $0x50] sm:$0xff]
        %v836 = vld [vmem:[#allocation8 + $0x58] sm:$0xff]
        %v837 = vld [vmem:[#allocation8 + $0x60] sm:$0xff]
        %v838 = vld [vmem:[#allocation8 + $0x68] sm:$0xff]
        %v839 = vld [vmem:[#allocation8 + $0x70] sm:$0xff]
        %v840 = vld [vmem:[#allocation8 + $0x78] sm:$0xff]
        %v841 = vld [vmem:[#allocation10] sm:$0x1]
        %v843 = vlaneseq
        %v844 = vshrl.u32 %v843, 7
        %v845 = vsub.s32 0, %v844
        %v846 = vrot.slane %v841, %v845
        %848 = vmatprep.subr.mxu0 0.0
        %849 = vmatpush1.msra.mxu0 %v825
        %850 = vmatprep.subr.mxu0 0.0
        %851 = vmatpush1.msra.mxu0 %v826
        %852 = vmatprep.subr.mxu0 0.0
        %853 = vmatpush1.msra.mxu0 %v827
        %854 = vmatprep.subr.mxu0 0.0
        %855 = vmatpush1.msra.mxu0 %v828
        %856 = vmatprep.subr.mxu0 0.0
        %857 = vmatpush1.msra.mxu0 %v829
        %858 = vmatprep.subr.mxu0 0.0
        %859 = vmatpush1.msra.mxu0 %v830
        %860 = vmatprep.subr.mxu0 0.0
        %861 = vmatpush1.msra.mxu0 %v831
        %862 = vmatprep.subr.mxu0 0.0
        %863 = vmatpush1.msra.mxu0 %v832
        %864 = vmatprep.subr.mxu0 0.0
        %865 = vmatpush1.msra.mxu0 %v833
        %866 = vmatprep.subr.mxu0 0.0
        %867 = vmatpush1.msra.mxu0 %v834
        %868 = vmatprep.subr.mxu0 0.0
        %869 = vmatpush1.msra.mxu0 %v835
        %870 = vmatprep.subr.mxu0 0.0
        %871 = vmatpush1.msra.mxu0 %v836
        %872 = vmatprep.subr.mxu0 0.0
        %873 = vmatpush1.msra.mxu0 %v837
        %874 = vmatprep.subr.mxu0 0.0
        %875 = vmatpush1.msra.mxu0 %v838
        %876 = vmatprep.subr.mxu0 0.0
        %877 = vmatpush1.msra.mxu0 %v839
        %878 = vmatprep.subr.mxu0 0.0
        %879 = vmatpush1.msra.mxu0 %v840
        %880 = vmatprep.subr.mxu0 0.0
        %881 = vmatpush1.msra.mxu0 0.0
        %882 = vmatprep.subr.mxu0 0.0
        %883 = vmatpush1.msra.mxu0 0.0
        %884 = vmatprep.subr.mxu0 0.0
        %885 = vmatpush1.msra.mxu0 0.0
        %886 = vmatprep.subr.mxu0 0.0
        %887 = vmatpush1.msra.mxu0 0.0
        %888 = vmatprep.subr.mxu0 0.0
        %889 = vmatpush1.msra.mxu0 0.0
        %890 = vmatprep.subr.mxu0 0.0
        %891 = vmatpush1.msra.mxu0 0.0
        %892 = vmatprep.subr.mxu0 0.0
        %893 = vmatpush1.msra.mxu0 0.0
        %894 = vmatprep.subr.mxu0 0.0
        %895 = vmatpush1.msra.mxu0 0.0
        %896 = vmatprep.subr.mxu0 0.0
        %897 = vmatpush1.msra.mxu0 0.0
        %898 = vmatprep.subr.mxu0 0.0
        %899 = vmatpush1.msra.mxu0 0.0
        %900 = vmatprep.subr.mxu0 0.0
        %901 = vmatpush1.msra.mxu0 0.0
        %902 = vmatprep.subr.mxu0 0.0
        %903 = vmatpush1.msra.mxu0 0.0
        %904 = vmatprep.subr.mxu0 0.0
        %905 = vmatpush1.msra.mxu0 0.0
        %906 = vmatprep.subr.mxu0 0.0
        %907 = vmatpush1.msra.mxu0 0.0
        %908 = vmatprep.subr.mxu0 0.0
        %909 = vmatpush1.msra.mxu0 0.0
        %910 = vmatprep.subr.mxu0 0.0
        %911 = vmatpush1.msra.mxu0 0.0
        %912 = vmatprep.mubr.f32.mxu0 0.0
        %913 = vmatmul.mubr.f32.gmra.mrb[0].mxu0 %v638
        %v914 = vpop.f32.mrb[0].mxu0
        %v915 = vadd.f32 %v846, %v914
        %v916 = vpop.f32.mrb[0].mxu0
        %917 = vdwg.mxu0
        %vm918 = vcmask 261120
        %v920 = vsel %vm918, %v729, 0
        %v923 = vsel %vm918, %v822, 0
        %925 = vmatprep.subr.mxu0 0.0
        %926 = vmatpush1.xpose.msra.mxu0 %v923
        %927 = vmatprep.subr.mxu0 0.0
        %928 = vmatpush1.xpose.msra.mxu0 0.0
        %929 = vmatprep.subr.mxu0 0.0
        %930 = vmatpush1.xpose.msra.mxu0 0.0
        %931 = vmatprep.subr.mxu0 0.0
        %932 = vmatpush1.xpose.msra.mxu0 0.0
        %933 = vmatprep.subr.mxu0 0.0
        %934 = vmatpush1.xpose.msra.mxu0 0.0
        %935 = vmatprep.subr.mxu0 0.0
        %936 = vmatpush1.xpose.msra.mxu0 0.0
        %937 = vmatprep.subr.mxu0 0.0
        %938 = vmatpush1.xpose.msra.mxu0 0.0
        %939 = vmatprep.subr.mxu0 0.0
        %940 = vmatpush1.xpose.msra.mxu0 0.0
        %941 = vmatprep.subr.mxu0 0.0
        %942 = vmatpush1.xpose.msra.mxu0 0.0
        %943 = vmatprep.subr.mxu0 0.0
        %944 = vmatpush1.xpose.msra.mxu0 0.0
        %945 = vmatprep.subr.mxu0 0.0
        %946 = vmatpush1.xpose.msra.mxu0 0.0
        %947 = vmatprep.subr.mxu0 0.0
        %948 = vmatpush1.xpose.msra.mxu0 0.0
        %949 = vmatprep.subr.mxu0 0.0
        %950 = vmatpush1.xpose.msra.mxu0 0.0
        %951 = vmatprep.subr.mxu0 0.0
        %952 = vmatpush1.xpose.msra.mxu0 0.0
        %953 = vmatprep.subr.mxu0 0.0
        %954 = vmatpush1.xpose.msra.mxu0 0.0
        %955 = vmatprep.subr.mxu0 0.0
        %956 = vmatpush1.xpose.msra.mxu0 0.0
        %957 = vmatprep.subr.mxu0 0.0
        %958 = vmatpush1.xpose.msra.mxu0 0.0
        %959 = vmatprep.subr.mxu0 0.0
        %960 = vmatpush1.xpose.msra.mxu0 0.0
        %961 = vmatprep.subr.mxu0 0.0
        %962 = vmatpush1.xpose.msra.mxu0 0.0
        %963 = vmatprep.subr.mxu0 0.0
        %964 = vmatpush1.xpose.msra.mxu0 0.0
        %965 = vmatprep.subr.mxu0 0.0
        %966 = vmatpush1.xpose.msra.mxu0 0.0
        %967 = vmatprep.subr.mxu0 0.0
        %968 = vmatpush1.xpose.msra.mxu0 0.0
        %969 = vmatprep.subr.mxu0 0.0
        %970 = vmatpush1.xpose.msra.mxu0 0.0
        %971 = vmatprep.subr.mxu0 0.0
        %972 = vmatpush1.xpose.msra.mxu0 0.0
        %973 = vmatprep.subr.mxu0 0.0
        %974 = vmatpush1.xpose.msra.mxu0 0.0
        %975 = vmatprep.subr.mxu0 0.0
        %976 = vmatpush1.xpose.msra.mxu0 0.0
        %977 = vmatprep.subr.mxu0 0.0
        %978 = vmatpush1.xpose.msra.mxu0 0.0
        %979 = vmatprep.subr.mxu0 0.0
        %980 = vmatpush1.xpose.msra.mxu0 0.0
        %981 = vmatprep.subr.mxu0 0.0
        %982 = vmatpush1.xpose.msra.mxu0 0.0
        %983 = vmatprep.subr.mxu0 0.0
        %984 = vmatpush1.xpose.msra.mxu0 0.0
        %985 = vmatprep.subr.mxu0 0.0
        %986 = vmatpush1.xpose.msra.mxu0 0.0
        %987 = vmatprep.subr.mxu0 0.0
        %988 = vmatpush1.xpose.msra.mxu0 0.0
        %989 = vmatprep.mubr.f32.mxu0 0.0
        %990 = vmatmul.mubr.f32.gmra.mrb[0].mxu0 %v920
        %v991 = vpop.f32.mrb[0].mxu0
        %v992 = vadd.f32 0.0, %v991
        %v993 = vpop.f32.mrb[0].mxu0
        %994 = vdwg.mxu0
        %v995 = vmul.f32 %v992, 0.17677669
        %vm996 = vcmask 64512
        %v997 = vsel %vm996, %v995, -inf
        %998 = vmax.xlane.f32.xlu0 %v997
        %v999 = vpop.xlane.xlu0 %998
        %v1000 = vsub.f32 %v995, %v999
        %v1001 = vmul.f32 %v1000, 1.442695
        %v1002 = vpow.pop %v1001
        %v1003 = vsel %vm996, %v1002, 0.0
        %1004 = vadd.xlane.f32.xlu0 %v1003
        %v1005 = vpop.xlane.xlu0 %1004
        %v1006 = vrcp.pop %v1005
        %v1007 = vmul.f32 %v1002, %v1006
        %v1009 = vsel %vm996, %v1007, 0
        %1011 = vmatprep.subr.mxu0 0.0
        %1012 = vmatpush1.msra.mxu0 %v915
        %1013 = vmatprep.subr.mxu0 0.0
        %1014 = vmatpush1.msra.mxu0 0.0
        %1015 = vmatprep.subr.mxu0 0.0
        %1016 = vmatpush1.msra.mxu0 0.0
        %1017 = vmatprep.subr.mxu0 0.0
        %1018 = vmatpush1.msra.mxu0 0.0
        %1019 = vmatprep.subr.mxu0 0.0
        %1020 = vmatpush1.msra.mxu0 0.0
        %1021 = vmatprep.subr.mxu0 0.0
        %1022 = vmatpush1.msra.mxu0 0.0
        %1023 = vmatprep.subr.mxu0 0.0
        %1024 = vmatpush1.msra.mxu0 0.0
        %1025 = vmatprep.subr.mxu0 0.0
        %1026 = vmatpush1.msra.mxu0 0.0
        %1027 = vmatprep.subr.mxu0 0.0
        %1028 = vmatpush1.msra.mxu0 0.0
        %1029 = vmatprep.subr.mxu0 0.0
        %1030 = vmatpush1.msra.mxu0 0.0
        %1031 = vmatprep.subr.mxu0 0.0
        %1032 = vmatpush1.msra.mxu0 0.0
        %1033 = vmatprep.subr.mxu0 0.0
        %1034 = vmatpush1.msra.mxu0 0.0
        %1035 = vmatprep.subr.mxu0 0.0
        %1036 = vmatpush1.msra.mxu0 0.0
        %1037 = vmatprep.subr.mxu0 0.0
        %1038 = vmatpush1.msra.mxu0 0.0
        %1039 = vmatprep.subr.mxu0 0.0
        %1040 = vmatpush1.msra.mxu0 0.0
        %1041 = vmatprep.subr.mxu0 0.0
        %1042 = vmatpush1.msra.mxu0 0.0
        %1043 = vmatprep.subr.mxu0 0.0
        %1044 = vmatpush1.msra.mxu0 0.0
        %1045 = vmatprep.subr.mxu0 0.0
        %1046 = vmatpush1.msra.mxu0 0.0
        %1047 = vmatprep.subr.mxu0 0.0
        %1048 = vmatpush1.msra.mxu0 0.0
        %1049 = vmatprep.subr.mxu0 0.0
        %1050 = vmatpush1.msra.mxu0 0.0
        %1051 = vmatprep.subr.mxu0 0.0
        %1052 = vmatpush1.msra.mxu0 0.0
        %1053 = vmatprep.subr.mxu0 0.0
        %1054 = vmatpush1.msra.mxu0 0.0
        %1055 = vmatprep.subr.mxu0 0.0
        %1056 = vmatpush1.msra.mxu0 0.0
        %1057 = vmatprep.subr.mxu0 0.0
        %1058 = vmatpush1.msra.mxu0 0.0
        %1059 = vmatprep.subr.mxu0 0.0
        %1060 = vmatpush1.msra.mxu0 0.0
        %1061 = vmatprep.subr.mxu0 0.0
        %1062 = vmatpush1.msra.mxu0 0.0
        %1063 = vmatprep.subr.mxu0 0.0
        %1064 = vmatpush1.msra.mxu0 0.0
        %1065 = vmatprep.subr.mxu0 0.0
        %1066 = vmatpush1.msra.mxu0 0.0
        %1067 = vmatprep.subr.mxu0 0.0
        %1068 = vmatpush1.msra.mxu0 0.0
        %1069 = vmatprep.subr.mxu0 0.0
        %1070 = vmatpush1.msra.mxu0 0.0
        %1071 = vmatprep.subr.mxu0 0.0
        %1072 = vmatpush1.msra.mxu0 0.0
        %1073 = vmatprep.subr.mxu0 0.0
        %1074 = vmatpush1.msra.mxu0 0.0
        %1075 = vmatprep.mubr.f32.mxu0 0.0
        %1076 = vmatmul.mubr.f32.gmra.mrb[0].mxu0 %v1009
        %v1077 = vpop.f32.mrb[0].mxu0
        %v1078 = vadd.f32 0.0, %v1077
        %v1079 = vpop.f32.mrb[0].mxu0
        %1080 = vdwg.mxu0
        %1081 = vrot.lane.b32.xlu0 %v729, 96
        %v1082 = vpop.permute.xlu0 %1081
        %1083 = vrot.lane.b32.xlu0 %v822, 96
        %v1084 = vpop.permute.xlu0 %1083
        %v1085 = vsel %vm918, %v1082, 0
        %v1087 = vsel %vm918, %v1084, 0
        %1089 = vmatprep.subr.mxu0 0.0
        %1090 = vmatpush1.xpose.msra.mxu0 %v1087
        %1091 = vmatprep.subr.mxu0 0.0
        %1092 = vmatpush1.xpose.msra.mxu0 0.0
        %1093 = vmatprep.subr.mxu0 0.0
        %1094 = vmatpush1.xpose.msra.mxu0 0.0
        %1095 = vmatprep.subr.mxu0 0.0
        %1096 = vmatpush1.xpose.msra.mxu0 0.0
        %1097 = vmatprep.subr.mxu0 0.0
        %1098 = vmatpush1.xpose.msra.mxu0 0.0
        %1099 = vmatprep.subr.mxu0 0.0
        %1100 = vmatpush1.xpose.msra.mxu0 0.0
        %1101 = vmatprep.subr.mxu0 0.0
        %1102 = vmatpush1.xpose.msra.mxu0 0.0
        %1103 = vmatprep.subr.mxu0 0.0
        %1104 = vmatpush1.xpose.msra.mxu0 0.0
        %1105 = vmatprep.subr.mxu0 0.0
        %1106 = vmatpush1.xpose.msra.mxu0 0.0
        %1107 = vmatprep.subr.mxu0 0.0
        %1108 = vmatpush1.xpose.msra.mxu0 0.0
        %1109 = vmatprep.subr.mxu0 0.0
        %1110 = vmatpush1.xpose.msra.mxu0 0.0
        %1111 = vmatprep.subr.mxu0 0.0
        %1112 = vmatpush1.xpose.msra.mxu0 0.0
        %1113 = vmatprep.subr.mxu0 0.0
        %1114 = vmatpush1.xpose.msra.mxu0 0.0
        %1115 = vmatprep.subr.mxu0 0.0
        %1116 = vmatpush1.xpose.msra.mxu0 0.0
        %1117 = vmatprep.subr.mxu0 0.0
        %1118 = vmatpush1.xpose.msra.mxu0 0.0
        %1119 = vmatprep.subr.mxu0 0.0
        %1120 = vmatpush1.xpose.msra.mxu0 0.0
        %1121 = vmatprep.subr.mxu0 0.0
        %1122 = vmatpush1.xpose.msra.mxu0 0.0
        %1123 = vmatprep.subr.mxu0 0.0
        %1124 = vmatpush1.xpose.msra.mxu0 0.0
        %1125 = vmatprep.subr.mxu0 0.0
        %1126 = vmatpush1.xpose.msra.mxu0 0.0
        %1127 = vmatprep.subr.mxu0 0.0
        %1128 = vmatpush1.xpose.msra.mxu0 0.0
        %1129 = vmatprep.subr.mxu0 0.0
        %1130 = vmatpush1.xpose.msra.mxu0 0.0
        %1131 = vmatprep.subr.mxu0 0.0
        %1132 = vmatpush1.xpose.msra.mxu0 0.0
        %1133 = vmatprep.subr.mxu0 0.0
        %1134 = vmatpush1.xpose.msra.mxu0 0.0
        %1135 = vmatprep.subr.mxu0 0.0
        %1136 = vmatpush1.xpose.msra.mxu0 0.0
        %1137 = vmatprep.subr.mxu0 0.0
        %1138 = vmatpush1.xpose.msra.mxu0 0.0
        %1139 = vmatprep.subr.mxu0 0.0
        %1140 = vmatpush1.xpose.msra.mxu0 0.0
        %1141 = vmatprep.subr.mxu0 0.0
        %1142 = vmatpush1.xpose.msra.mxu0 0.0
        %1143 = vmatprep.subr.mxu0 0.0
        %1144 = vmatpush1.xpose.msra.mxu0 0.0
        %1145 = vmatprep.subr.mxu0 0.0
        %1146 = vmatpush1.xpose.msra.mxu0 0.0
        %1147 = vmatprep.subr.mxu0 0.0
        %1148 = vmatpush1.xpose.msra.mxu0 0.0
        %1149 = vmatprep.subr.mxu0 0.0
        %1150 = vmatpush1.xpose.msra.mxu0 0.0
        %1151 = vmatprep.subr.mxu0 0.0
        %1152 = vmatpush1.xpose.msra.mxu0 0.0
        %1153 = vmatprep.mubr.f32.mxu0 0.0
        %1154 = vmatmul.mubr.f32.gmra.mrb[0].mxu0 %v1085
        %v1155 = vpop.f32.mrb[0].mxu0
        %v1156 = vadd.f32 0.0, %v1155
        %v1157 = vpop.f32.mrb[0].mxu0
        %1158 = vdwg.mxu0
        %v1159 = vmul.f32 %v1156, 0.17677669
        %v1160 = vsel %vm996, %v1159, -inf
        %1161 = vmax.xlane.f32.xlu0 %v1160
        %v1162 = vpop.xlane.xlu0 %1161
        %v1163 = vsub.f32 %v1159, %v1162
        %v1164 = vmul.f32 %v1163, 1.442695
        %v1165 = vpow.pop %v1164
        %v1166 = vsel %vm996, %v1165, 0.0
        %1167 = vadd.xlane.f32.xlu0 %v1166
        %v1168 = vpop.xlane.xlu0 %1167
        %v1169 = vrcp.pop %v1168
        %v1170 = vmul.f32 %v1165, %v1169
        %1172 = vrot.lane.b32.xlu0 %v915, 96
        %v1173 = vpop.permute.xlu0 %1172
        %v1176 = vsel %vm996, %v1170, 0
        %1178 = vmatprep.subr.mxu0 0.0
        %1179 = vmatpush1.msra.mxu0 %v1173
        %1180 = vmatprep.subr.mxu0 0.0
        %1181 = vmatpush1.msra.mxu0 0.0
        %1182 = vmatprep.subr.mxu0 0.0
        %1183 = vmatpush1.msra.mxu0 0.0
        %1184 = vmatprep.subr.mxu0 0.0
        %1185 = vmatpush1.msra.mxu0 0.0
        %1186 = vmatprep.subr.mxu0 0.0
        %1187 = vmatpush1.msra.mxu0 0.0
        %1188 = vmatprep.subr.mxu0 0.0
        %1189 = vmatpush1.msra.mxu0 0.0
        %1190 = vmatprep.subr.mxu0 0.0
        %1191 = vmatpush1.msra.mxu0 0.0
        %1192 = vmatprep.subr.mxu0 0.0
        %1193 = vmatpush1.msra.mxu0 0.0
        %1194 = vmatprep.subr.mxu0 0.0
        %1195 = vmatpush1.msra.mxu0 0.0
        %1196 = vmatprep.subr.mxu0 0.0
        %1197 = vmatpush1.msra.mxu0 0.0
        %1198 = vmatprep.subr.mxu0 0.0
        %1199 = vmatpush1.msra.mxu0 0.0
        %1200 = vmatprep.subr.mxu0 0.0
        %1201 = vmatpush1.msra.mxu0 0.0
        %1202 = vmatprep.subr.mxu0 0.0
        %1203 = vmatpush1.msra.mxu0 0.0
        %1204 = vmatprep.subr.mxu0 0.0
        %1205 = vmatpush1.msra.mxu0 0.0
        %1206 = vmatprep.subr.mxu0 0.0
        %1207 = vmatpush1.msra.mxu0 0.0
        %1208 = vmatprep.subr.mxu0 0.0
        %1209 = vmatpush1.msra.mxu0 0.0
        %1210 = vmatprep.subr.mxu0 0.0
        %1211 = vmatpush1.msra.mxu0 0.0
        %1212 = vmatprep.subr.mxu0 0.0
        %1213 = vmatpush1.msra.mxu0 0.0
        %1214 = vmatprep.subr.mxu0 0.0
        %1215 = vmatpush1.msra.mxu0 0.0
        %1216 = vmatprep.subr.mxu0 0.0
        %1217 = vmatpush1.msra.mxu0 0.0
        %1218 = vmatprep.subr.mxu0 0.0
        %1219 = vmatpush1.msra.mxu0 0.0
        %1220 = vmatprep.subr.mxu0 0.0
        %1221 = vmatpush1.msra.mxu0 0.0
        %1222 = vmatprep.subr.mxu0 0.0
        %1223 = vmatpush1.msra.mxu0 0.0
        %1224 = vmatprep.subr.mxu0 0.0
        %1225 = vmatpush1.msra.mxu0 0.0
        %1226 = vmatprep.subr.mxu0 0.0
        %1227 = vmatpush1.msra.mxu0 0.0
        %1228 = vmatprep.subr.mxu0 0.0
        %1229 = vmatpush1.msra.mxu0 0.0
        %1230 = vmatprep.subr.mxu0 0.0
        %1231 = vmatpush1.msra.mxu0 0.0
        %1232 = vmatprep.subr.mxu0 0.0
        %1233 = vmatpush1.msra.mxu0 0.0
        %1234 = vmatprep.subr.mxu0 0.0
        %1235 = vmatpush1.msra.mxu0 0.0
        %1236 = vmatprep.subr.mxu0 0.0
        %1237 = vmatpush1.msra.mxu0 0.0
        %1238 = vmatprep.subr.mxu0 0.0
        %1239 = vmatpush1.msra.mxu0 0.0
        %1240 = vmatprep.subr.mxu0 0.0
        %1241 = vmatpush1.msra.mxu0 0.0
        %1242 = vmatprep.mubr.f32.mxu0 0.0
        %1243 = vmatmul.mubr.f32.gmra.mrb[0].mxu0 %v1176
        %v1244 = vpop.f32.mrb[0].mxu0
        %v1245 = vadd.f32 0.0, %v1244
        %v1246 = vpop.f32.mrb[0].mxu0
        %1247 = vdwg.mxu0
        %1248 = vrot.lane.b32.xlu0 %v729, 64
        %v1249 = vpop.permute.xlu0 %1248
        %1250 = vrot.lane.b32.xlu0 %v822, 64
        %v1251 = vpop.permute.xlu0 %1250
        %v1252 = vsel %vm918, %v1249, 0
        %v1254 = vsel %vm918, %v1251, 0
        %1256 = vmatprep.subr.mxu0 0.0
        %1257 = vmatpush1.xpose.msra.mxu0 %v1254
        %1258 = vmatprep.subr.mxu0 0.0
        %1259 = vmatpush1.xpose.msra.mxu0 0.0
        %1260 = vmatprep.subr.mxu0 0.0
        %1261 = vmatpush1.xpose.msra.mxu0 0.0
        %1262 = vmatprep.subr.mxu0 0.0
        %1263 = vmatpush1.xpose.msra.mxu0 0.0
        %1264 = vmatprep.subr.mxu0 0.0
        %1265 = vmatpush1.xpose.msra.mxu0 0.0
        %1266 = vmatprep.subr.mxu0 0.0
        %1267 = vmatpush1.xpose.msra.mxu0 0.0
        %1268 = vmatprep.subr.mxu0 0.0
        %1269 = vmatpush1.xpose.msra.mxu0 0.0
        %1270 = vmatprep.subr.mxu0 0.0
        %1271 = vmatpush1.xpose.msra.mxu0 0.0
        %1272 = vmatprep.subr.mxu0 0.0
        %1273 = vmatpush1.xpose.msra.mxu0 0.0
        %1274 = vmatprep.subr.mxu0 0.0
        %1275 = vmatpush1.xpose.msra.mxu0 0.0
        %1276 = vmatprep.subr.mxu0 0.0
        %1277 = vmatpush1.xpose.msra.mxu0 0.0
        %1278 = vmatprep.subr.mxu0 0.0
        %1279 = vmatpush1.xpose.msra.mxu0 0.0
        %1280 = vmatprep.subr.mxu0 0.0
        %1281 = vmatpush1.xpose.msra.mxu0 0.0
        %1282 = vmatprep.subr.mxu0 0.0
        %1283 = vmatpush1.xpose.msra.mxu0 0.0
        %1284 = vmatprep.subr.mxu0 0.0
        %1285 = vmatpush1.xpose.msra.mxu0 0.0
        %1286 = vmatprep.subr.mxu0 0.0
        %1287 = vmatpush1.xpose.msra.mxu0 0.0
        %1288 = vmatprep.subr.mxu0 0.0
        %1289 = vmatpush1.xpose.msra.mxu0 0.0
        %1290 = vmatprep.subr.mxu0 0.0
        %1291 = vmatpush1.xpose.msra.mxu0 0.0
        %1292 = vmatprep.subr.mxu0 0.0
        %1293 = vmatpush1.xpose.msra.mxu0 0.0
        %1294 = vmatprep.subr.mxu0 0.0
        %1295 = vmatpush1.xpose.msra.mxu0 0.0
        %1296 = vmatprep.subr.mxu0 0.0
        %1297 = vmatpush1.xpose.msra.mxu0 0.0
        %1298 = vmatprep.subr.mxu0 0.0
        %1299 = vmatpush1.xpose.msra.mxu0 0.0
        %1300 = vmatprep.subr.mxu0 0.0
        %1301 = vmatpush1.xpose.msra.mxu0 0.0
        %1302 = vmatprep.subr.mxu0 0.0
        %1303 = vmatpush1.xpose.msra.mxu0 0.0
        %1304 = vmatprep.subr.mxu0 0.0
        %1305 = vmatpush1.xpose.msra.mxu0 0.0
        %1306 = vmatprep.subr.mxu0 0.0
        %1307 = vmatpush1.xpose.msra.mxu0 0.0
        %1308 = vmatprep.subr.mxu0 0.0
        %1309 = vmatpush1.xpose.msra.mxu0 0.0
        %1310 = vmatprep.subr.mxu0 0.0
        %1311 = vmatpush1.xpose.msra.mxu0 0.0
        %1312 = vmatprep.subr.mxu0 0.0
        %1313 = vmatpush1.xpose.msra.mxu0 0.0
        %1314 = vmatprep.subr.mxu0 0.0
        %1315 = vmatpush1.xpose.msra.mxu0 0.0
        %1316 = vmatprep.subr.mxu0 0.0
        %1317 = vmatpush1.xpose.msra.mxu0 0.0
        %1318 = vmatprep.subr.mxu0 0.0
        %1319 = vmatpush1.xpose.msra.mxu0 0.0
        %1320 = vmatprep.mubr.f32.mxu0 0.0
        %1321 = vmatmul.mubr.f32.gmra.mrb[0].mxu0 %v1252
        %v1322 = vpop.f32.mrb[0].mxu0
        %v1323 = vadd.f32 0.0, %v1322
        %v1324 = vpop.f32.mrb[0].mxu0
        %1325 = vdwg.mxu0
        %v1326 = vmul.f32 %v1323, 0.17677669
        %v1327 = vsel %vm996, %v1326, -inf
        %1328 = vmax.xlane.f32.xlu0 %v1327
        %v1329 = vpop.xlane.xlu0 %1328
        %v1330 = vsub.f32 %v1326, %v1329
        %v1331 = vmul.f32 %v1330, 1.442695
        %v1332 = vpow.pop %v1331
        %v1333 = vsel %vm996, %v1332, 0.0
        %1334 = vadd.xlane.f32.xlu0 %v1333
        %v1335 = vpop.xlane.xlu0 %1334
        %v1336 = vrcp.pop %v1335
        %v1337 = vmul.f32 %v1332, %v1336
        %1338 = vrot.lane.b32.xlu0 %v915, 64
        %v1339 = vpop.permute.xlu0 %1338
        %v1342 = vsel %vm996, %v1337, 0
        %1344 = vmatprep.subr.mxu0 0.0
        %1345 = vmatpush1.msra.mxu0 %v1339
        %1346 = vmatprep.subr.mxu0 0.0
        %1347 = vmatpush1.msra.mxu0 0.0
        %1348 = vmatprep.subr.mxu0 0.0
        %1349 = vmatpush1.msra.mxu0 0.0
        %1350 = vmatprep.subr.mxu0 0.0
        %1351 = vmatpush1.msra.mxu0 0.0
        %1352 = vmatprep.subr.mxu0 0.0
        %1353 = vmatpush1.msra.mxu0 0.0
        %1354 = vmatprep.subr.mxu0 0.0
        %1355 = vmatpush1.msra.mxu0 0.0
        %1356 = vmatprep.subr.mxu0 0.0
        %1357 = vmatpush1.msra.mxu0 0.0
        %1358 = vmatprep.subr.mxu0 0.0
        %1359 = vmatpush1.msra.mxu0 0.0
        %1360 = vmatprep.subr.mxu0 0.0
        %1361 = vmatpush1.msra.mxu0 0.0
        %1362 = vmatprep.subr.mxu0 0.0
        %1363 = vmatpush1.msra.mxu0 0.0
        %1364 = vmatprep.subr.mxu0 0.0
        %1365 = vmatpush1.msra.mxu0 0.0
        %1366 = vmatprep.subr.mxu0 0.0
        %1367 = vmatpush1.msra.mxu0 0.0
        %1368 = vmatprep.subr.mxu0 0.0
        %1369 = vmatpush1.msra.mxu0 0.0
        %1370 = vmatprep.subr.mxu0 0.0
        %1371 = vmatpush1.msra.mxu0 0.0
        %1372 = vmatprep.subr.mxu0 0.0
        %1373 = vmatpush1.msra.mxu0 0.0
        %1374 = vmatprep.subr.mxu0 0.0
        %1375 = vmatpush1.msra.mxu0 0.0
        %1376 = vmatprep.subr.mxu0 0.0
        %1377 = vmatpush1.msra.mxu0 0.0
        %1378 = vmatprep.subr.mxu0 0.0
        %1379 = vmatpush1.msra.mxu0 0.0
        %1380 = vmatprep.subr.mxu0 0.0
        %1381 = vmatpush1.msra.mxu0 0.0
        %1382 = vmatprep.subr.mxu0 0.0
        %1383 = vmatpush1.msra.mxu0 0.0
        %1384 = vmatprep.subr.mxu0 0.0
        %1385 = vmatpush1.msra.mxu0 0.0
        %1386 = vmatprep.subr.mxu0 0.0
        %1387 = vmatpush1.msra.mxu0 0.0
        %1388 = vmatprep.subr.mxu0 0.0
        %1389 = vmatpush1.msra.mxu0 0.0
        %1390 = vmatprep.subr.mxu0 0.0
        %1391 = vmatpush1.msra.mxu0 0.0
        %1392 = vmatprep.subr.mxu0 0.0
        %1393 = vmatpush1.msra.mxu0 0.0
        %1394 = vmatprep.subr.mxu0 0.0
        %1395 = vmatpush1.msra.mxu0 0.0
        %1396 = vmatprep.subr.mxu0 0.0
        %1397 = vmatpush1.msra.mxu0 0.0
        %1398 = vmatprep.subr.mxu0 0.0
        %1399 = vmatpush1.msra.mxu0 0.0
        %1400 = vmatprep.subr.mxu0 0.0
        %1401 = vmatpush1.msra.mxu0 0.0
        %1402 = vmatprep.subr.mxu0 0.0
        %1403 = vmatpush1.msra.mxu0 0.0
        %1404 = vmatprep.subr.mxu0 0.0
        %1405 = vmatpush1.msra.mxu0 0.0
        %1406 = vmatprep.subr.mxu0 0.0
        %1407 = vmatpush1.msra.mxu0 0.0
        %1408 = vmatprep.mubr.f32.mxu0 0.0
        %1409 = vmatmul.mubr.f32.gmra.mrb[0].mxu0 %v1342
        %v1410 = vpop.f32.mrb[0].mxu0
        %v1411 = vadd.f32 0.0, %v1410
        %v1412 = vpop.f32.mrb[0].mxu0
        %1413 = vdwg.mxu0
        %1414 = vrot.lane.b32.xlu0 %v729, 32
        %v1415 = vpop.permute.xlu0 %1414
        %1416 = vrot.lane.b32.xlu0 %v822, 32
        %v1417 = vpop.permute.xlu0 %1416
        %v1418 = vsel %vm918, %v1415, 0
        %v1420 = vsel %vm918, %v1417, 0
        %1422 = vmatprep.subr.mxu0 0.0
        %1423 = vmatpush1.xpose.msra.mxu0 %v1420
        %1424 = vmatprep.subr.mxu0 0.0
        %1425 = vmatpush1.xpose.msra.mxu0 0.0
        %1426 = vmatprep.subr.mxu0 0.0
        %1427 = vmatpush1.xpose.msra.mxu0 0.0
        %1428 = vmatprep.subr.mxu0 0.0
        %1429 = vmatpush1.xpose.msra.mxu0 0.0
        %1430 = vmatprep.subr.mxu0 0.0
        %1431 = vmatpush1.xpose.msra.mxu0 0.0
        %1432 = vmatprep.subr.mxu0 0.0
        %1433 = vmatpush1.xpose.msra.mxu0 0.0
        %1434 = vmatprep.subr.mxu0 0.0
        %1435 = vmatpush1.xpose.msra.mxu0 0.0
        %1436 = vmatprep.subr.mxu0 0.0
        %1437 = vmatpush1.xpose.msra.mxu0 0.0
        %1438 = vmatprep.subr.mxu0 0.0
        %1439 = vmatpush1.xpose.msra.mxu0 0.0
        %1440 = vmatprep.subr.mxu0 0.0
        %1441 = vmatpush1.xpose.msra.mxu0 0.0
        %1442 = vmatprep.subr.mxu0 0.0
        %1443 = vmatpush1.xpose.msra.mxu0 0.0
        %1444 = vmatprep.subr.mxu0 0.0
        %1445 = vmatpush1.xpose.msra.mxu0 0.0
        %1446 = vmatprep.subr.mxu0 0.0
        %1447 = vmatpush1.xpose.msra.mxu0 0.0
        %1448 = vmatprep.subr.mxu0 0.0
        %1449 = vmatpush1.xpose.msra.mxu0 0.0
        %1450 = vmatprep.subr.mxu0 0.0
        %1451 = vmatpush1.xpose.msra.mxu0 0.0
        %1452 = vmatprep.subr.mxu0 0.0
        %1453 = vmatpush1.xpose.msra.mxu0 0.0
        %1454 = vmatprep.subr.mxu0 0.0
        %1455 = vmatpush1.xpose.msra.mxu0 0.0
        %1456 = vmatprep.subr.mxu0 0.0
        %1457 = vmatpush1.xpose.msra.mxu0 0.0
        %1458 = vmatprep.subr.mxu0 0.0
        %1459 = vmatpush1.xpose.msra.mxu0 0.0
        %1460 = vmatprep.subr.mxu0 0.0
        %1461 = vmatpush1.xpose.msra.mxu0 0.0
        %1462 = vmatprep.subr.mxu0 0.0
        %1463 = vmatpush1.xpose.msra.mxu0 0.0
        %1464 = vmatprep.subr.mxu0 0.0
        %1465 = vmatpush1.xpose.msra.mxu0 0.0
        %1466 = vmatprep.subr.mxu0 0.0
        %1467 = vmatpush1.xpose.msra.mxu0 0.0
        %1468 = vmatprep.subr.mxu0 0.0
        %1469 = vmatpush1.xpose.msra.mxu0 0.0
        %1470 = vmatprep.subr.mxu0 0.0
        %1471 = vmatpush1.xpose.msra.mxu0 0.0
        %1472 = vmatprep.subr.mxu0 0.0
        %1473 = vmatpush1.xpose.msra.mxu0 0.0
        %1474 = vmatprep.subr.mxu0 0.0
        %1475 = vmatpush1.xpose.msra.mxu0 0.0
        %1476 = vmatprep.subr.mxu0 0.0
        %1477 = vmatpush1.xpose.msra.mxu0 0.0
        %1478 = vmatprep.subr.mxu0 0.0
        %1479 = vmatpush1.xpose.msra.mxu0 0.0
        %1480 = vmatprep.subr.mxu0 0.0
        %1481 = vmatpush1.xpose.msra.mxu0 0.0
        %1482 = vmatprep.subr.mxu0 0.0
        %1483 = vmatpush1.xpose.msra.mxu0 0.0
        %1484 = vmatprep.subr.mxu0 0.0
        %1485 = vmatpush1.xpose.msra.mxu0 0.0
        %1486 = vmatprep.mubr.f32.mxu0 0.0
        %1487 = vmatmul.mubr.f32.gmra.mrb[0].mxu0 %v1418
        %v1488 = vpop.f32.mrb[0].mxu0
        %v1489 = vadd.f32 0.0, %v1488
        %v1490 = vpop.f32.mrb[0].mxu0
        %1491 = vdwg.mxu0
        %v1492 = vmul.f32 %v1489, 0.17677669
        %v1493 = vsel %vm996, %v1492, -inf
        %1494 = vmax.xlane.f32.xlu0 %v1493
        %v1495 = vpop.xlane.xlu0 %1494
        %v1496 = vsub.f32 %v1492, %v1495
        %v1497 = vmul.f32 %v1496, 1.442695
        %v1498 = vpow.pop %v1497
        %v1499 = vsel %vm996, %v1498, 0.0
        %1500 = vadd.xlane.f32.xlu0 %v1499
        %v1501 = vpop.xlane.xlu0 %1500
        %v1502 = vrcp.pop %v1501
        %v1503 = vmul.f32 %v1498, %v1502
        %1504 = vrot.lane.b32.xlu0 %v915, 32
        %v1505 = vpop.permute.xlu0 %1504
        %v1508 = vsel %vm996, %v1503, 0
        %1510 = vmatprep.subr.mxu0 0.0
        %1511 = vmatpush1.msra.mxu0 %v1505
        %1512 = vmatprep.subr.mxu0 0.0
        %1513 = vmatpush1.msra.mxu0 0.0
        %1514 = vmatprep.subr.mxu0 0.0
        %1515 = vmatpush1.msra.mxu0 0.0
        %1516 = vmatprep.subr.mxu0 0.0
        %1517 = vmatpush1.msra.mxu0 0.0
        %1518 = vmatprep.subr.mxu0 0.0
        %1519 = vmatpush1.msra.mxu0 0.0
        %1520 = vmatprep.subr.mxu0 0.0
        %1521 = vmatpush1.msra.mxu0 0.0
        %1522 = vmatprep.subr.mxu0 0.0
        %1523 = vmatpush1.msra.mxu0 0.0
        %1524 = vmatprep.subr.mxu0 0.0
        %1525 = vmatpush1.msra.mxu0 0.0
        %1526 = vmatprep.subr.mxu0 0.0
        %1527 = vmatpush1.msra.mxu0 0.0
        %1528 = vmatprep.subr.mxu0 0.0
        %1529 = vmatpush1.msra.mxu0 0.0
        %1530 = vmatprep.subr.mxu0 0.0
        %1531 = vmatpush1.msra.mxu0 0.0
        %1532 = vmatprep.subr.mxu0 0.0
        %1533 = vmatpush1.msra.mxu0 0.0
        %1534 = vmatprep.subr.mxu0 0.0
        %1535 = vmatpush1.msra.mxu0 0.0
        %1536 = vmatprep.subr.mxu0 0.0
        %1537 = vmatpush1.msra.mxu0 0.0
        %1538 = vmatprep.subr.mxu0 0.0
        %1539 = vmatpush1.msra.mxu0 0.0
        %1540 = vmatprep.subr.mxu0 0.0
        %1541 = vmatpush1.msra.mxu0 0.0
        %1542 = vmatprep.subr.mxu0 0.0
        %1543 = vmatpush1.msra.mxu0 0.0
        %1544 = vmatprep.subr.mxu0 0.0
        %1545 = vmatpush1.msra.mxu0 0.0
        %1546 = vmatprep.subr.mxu0 0.0
        %1547 = vmatpush1.msra.mxu0 0.0
        %1548 = vmatprep.subr.mxu0 0.0
        %1549 = vmatpush1.msra.mxu0 0.0
        %1550 = vmatprep.subr.mxu0 0.0
        %1551 = vmatpush1.msra.mxu0 0.0
        %1552 = vmatprep.subr.mxu0 0.0
        %1553 = vmatpush1.msra.mxu0 0.0
        %1554 = vmatprep.subr.mxu0 0.0
        %1555 = vmatpush1.msra.mxu0 0.0
        %1556 = vmatprep.subr.mxu0 0.0
        %1557 = vmatpush1.msra.mxu0 0.0
        %1558 = vmatprep.subr.mxu0 0.0
        %1559 = vmatpush1.msra.mxu0 0.0
        %1560 = vmatprep.subr.mxu0 0.0
        %1561 = vmatpush1.msra.mxu0 0.0
        %1562 = vmatprep.subr.mxu0 0.0
        %1563 = vmatpush1.msra.mxu0 0.0
        %1564 = vmatprep.subr.mxu0 0.0
        %1565 = vmatpush1.msra.mxu0 0.0
        %1566 = vmatprep.subr.mxu0 0.0
        %1567 = vmatpush1.msra.mxu0 0.0
        %1568 = vmatprep.subr.mxu0 0.0
        %1569 = vmatpush1.msra.mxu0 0.0
        %1570 = vmatprep.subr.mxu0 0.0
        %1571 = vmatpush1.msra.mxu0 0.0
        %1572 = vmatprep.subr.mxu0 0.0
        %1573 = vmatpush1.msra.mxu0 0.0
        %1574 = vmatprep.mubr.f32.mxu0 0.0
        %1575 = vmatmul.mubr.f32.gmra.mrb[0].mxu0 %v1508
        %v1576 = vpop.f32.mrb[0].mxu0
        %v1577 = vadd.f32 0.0, %v1576
        %v1578 = vpop.f32.mrb[0].mxu0
        %1579 = vdwg.mxu0
        %1581 = vrot.lane.b32.xlu0 %v1245, 32
        %v1582 = vpop.permute.xlu0 %1581
        %1585 = vrot.lane.b32.xlu0 %v1411, 64
        %v1586 = vpop.permute.xlu0 %1585
        %1589 = vrot.lane.b32.xlu0 %v1577, 96
        %v1590 = vpop.permute.xlu0 %1589
        %v1592 = vsel %vm918, %v1078, %v1582
        %vm1593 = vcmask 523264
        %v1594 = vsel %vm1593, %v1592, %v1586
        %vm1595 = vcmask 785408
        %v1596 = vsel %vm1595, %v1594, %v1590
        %v1597 = vld [vmem:[#allocation11] sm:$0xff]
        %v1598 = vld [vmem:[#allocation11 + $0x8] sm:$0xff]
        %v1599 = vld [vmem:[#allocation11 + $0x10] sm:$0xff]
        %v1600 = vld [vmem:[#allocation11 + $0x18] sm:$0xff]
        %v1601 = vld [vmem:[#allocation11 + $0x20] sm:$0xff]
        %v1602 = vld [vmem:[#allocation11 + $0x28] sm:$0xff]
        %v1603 = vld [vmem:[#allocation11 + $0x30] sm:$0xff]
        %v1604 = vld [vmem:[#allocation11 + $0x38] sm:$0xff]
        %v1605 = vld [vmem:[#allocation11 + $0x40] sm:$0xff]
        %v1606 = vld [vmem:[#allocation11 + $0x48] sm:$0xff]
        %v1607 = vld [vmem:[#allocation11 + $0x50] sm:$0xff]
        %v1608 = vld [vmem:[#allocation11 + $0x58] sm:$0xff]
        %v1609 = vld [vmem:[#allocation11 + $0x60] sm:$0xff]
        %v1610 = vld [vmem:[#allocation11 + $0x68] sm:$0xff]
        %v1611 = vld [vmem:[#allocation11 + $0x70] sm:$0xff]
        %v1612 = vld [vmem:[#allocation11 + $0x78] sm:$0xff]
        %v1613 = vld [vmem:[#allocation13] sm:$0x1]
        %v1615 = vlaneseq
        %v1616 = vshrl.u32 %v1615, 7
        %v1617 = vsub.s32 0, %v1616
        %v1618 = vrot.slane %v1613, %v1617
        %1620 = vmatprep.subr.mxu0 0.0
        %1621 = vmatpush1.msra.mxu0 %v1597
        %1622 = vmatprep.subr.mxu0 0.0
        %1623 = vmatpush1.msra.mxu0 %v1598
        %1624 = vmatprep.subr.mxu0 0.0
        %1625 = vmatpush1.msra.mxu0 %v1599
        %1626 = vmatprep.subr.mxu0 0.0
        %1627 = vmatpush1.msra.mxu0 %v1600
        %1628 = vmatprep.subr.mxu0 0.0
        %1629 = vmatpush1.msra.mxu0 %v1601
        %1630 = vmatprep.subr.mxu0 0.0
        %1631 = vmatpush1.msra.mxu0 %v1602
        %1632 = vmatprep.subr.mxu0 0.0
        %1633 = vmatpush1.msra.mxu0 %v1603
        %1634 = vmatprep.subr.mxu0 0.0
        %1635 = vmatpush1.msra.mxu0 %v1604
        %1636 = vmatprep.subr.mxu0 0.0
        %1637 = vmatpush1.msra.mxu0 %v1605
        %1638 = vmatprep.subr.mxu0 0.0
        %1639 = vmatpush1.msra.mxu0 %v1606
        %1640 = vmatprep.subr.mxu0 0.0
        %1641 = vmatpush1.msra.mxu0 %v1607
        %1642 = vmatprep.subr.mxu0 0.0
        %1643 = vmatpush1.msra.mxu0 %v1608
        %1644 = vmatprep.subr.mxu0 0.0
        %1645 = vmatpush1.msra.mxu0 %v1609
        %1646 = vmatprep.subr.mxu0 0.0
        %1647 = vmatpush1.msra.mxu0 %v1610
        %1648 = vmatprep.subr.mxu0 0.0
        %1649 = vmatpush1.msra.mxu0 %v1611
        %1650 = vmatprep.subr.mxu0 0.0
        %1651 = vmatpush1.msra.mxu0 %v1612
        %1652 = vmatprep.subr.mxu0 0.0
        %1653 = vmatpush1.msra.mxu0 0.0
        %1654 = vmatprep.subr.mxu0 0.0
        %1655 = vmatpush1.msra.mxu0 0.0
        %1656 = vmatprep.subr.mxu0 0.0
        %1657 = vmatpush1.msra.mxu0 0.0
        %1658 = vmatprep.subr.mxu0 0.0
        %1659 = vmatpush1.msra.mxu0 0.0
        %1660 = vmatprep.subr.mxu0 0.0
        %1661 = vmatpush1.msra.mxu0 0.0
        %1662 = vmatprep.subr.mxu0 0.0
        %1663 = vmatpush1.msra.mxu0 0.0
        %1664 = vmatprep.subr.mxu0 0.0
        %1665 = vmatpush1.msra.mxu0 0.0
        %1666 = vmatprep.subr.mxu0 0.0
        %1667 = vmatpush1.msra.mxu0 0.0
        %1668 = vmatprep.subr.mxu0 0.0
        %1669 = vmatpush1.msra.mxu0 0.0
        %1670 = vmatprep.subr.mxu0 0.0
        %1671 = vmatpush1.msra.mxu0 0.0
        %1672 = vmatprep.subr.mxu0 0.0
        %1673 = vmatpush1.msra.mxu0 0.0
        %1674 = vmatprep.subr.mxu0 0.0
        %1675 = vmatpush1.msra.mxu0 0.0
        %1676 = vmatprep.subr.mxu0 0.0
        %1677 = vmatpush1.msra.mxu0 0.0
        %1678 = vmatprep.subr.mxu0 0.0
        %1679 = vmatpush1.msra.mxu0 0.0
        %1680 = vmatprep.subr.mxu0 0.0
        %1681 = vmatpush1.msra.mxu0 0.0
        %1682 = vmatprep.subr.mxu0 0.0
        %1683 = vmatpush1.msra.mxu0 0.0
        %1684 = vmatprep.mubr.f32.mxu0 0.0
        %1685 = vmatmul.mubr.f32.gmra.mrb[0].mxu0 %v1596
        %v1686 = vpop.f32.mrb[0].mxu0
        %v1687 = vadd.f32 %v1618, %v1686
        %v1688 = vpop.f32.mrb[0].mxu0
        %1689 = vdwg.mxu0
        %v1690 = vadd.f32 %v1687, %v636
        %1691 = vadd.xlane.f32.xlu0 %v1690
        %v1692 = vpop.xlane.xlu0 %1691
        %v1693 = vrcp.pop 128.0
        %v1694 = vmul.f32 %v1692, %v1693
        %v1695 = vsub.f32 %v1690, %v1694
        %v1696 = vmul.f32 %v1695, %v1695
        %1697 = vadd.xlane.f32.xlu0 %v1696
        %v1698 = vpop.xlane.xlu0 %1697
        %v1699 = vmul.f32 %v1698, %v1693
        %v1700 = vadd.f32 %v1699, 1e-05
        %v1701 = vrsqrt.pop %v1700
        %v1702 = vmul.f32 %v1695, %v1701
        %v1703 = vld [vmem:[#allocation14] sm:$0x1]
        %v1705 = vlaneseq
        %v1706 = vshrl.u32 %v1705, 7
        %v1707 = vsub.s32 0, %v1706
        %v1708 = vrot.slane %v1703, %v1707
        %v1710 = vmul.f32 %v1702, %v1708
        %v1711 = vld [vmem:[#allocation16] sm:$0x1]
        %v1713 = vlaneseq
        %v1714 = vshrl.u32 %v1713, 7
        %v1715 = vsub.s32 0, %v1714
        %v1716 = vrot.slane %v1711, %v1715
        %v1718 = vadd.f32 %v1710, %v1716
        %1719 = vst [vmem:[%s620] sm:$0xff] %v1718
        %1720 = vst.msk [vmem:[%s627] sm:$0xff] %vm996, %v1007
        %1721 = vst.msk [vmem:[%s627 + $0x8] sm:$0xff] %vm996, %v1170
        %1722 = vst.msk [vmem:[%s627 + $0x10] sm:$0xff] %vm996, %v1337
        %1723 = vst.msk [vmem:[%s627 + $0x18] sm:$0xff] %vm996, %v1503
        %s1724 = sand.u32 %s335, 1
        %s1725 = scalar_lea.sflag [#allocation4], %s1724
        %s1726 = sand.u32 %s335, 1
        %s1727 = smul.addr %s1726, 8
        %s1728 = scalar_lea.vmem [#allocation17], %s1727
        %s1729 = sand.u32 %s361, 1
        %s1730 = scalar_lea.sflag [#allocation19], %s1729
        %s1731 = sand.u32 %s361, 1
        %s1732 = smul.addr %s1731, 32
        %s1733 = scalar_lea.vmem [#allocation18], %s1732
        // Predicated region
        $region109: #{mha_bow_forward.1} parent=71 // pred_check
          %p1734 = pneg %p345
        $region110: #{mha_bow_forward.1} parent=71 // pred_check_branch
          %1736 = sbr.rel (%p1734) target = $region112
        $region111: #{mha_bow_forward.1} parent=71 // pred_region
          %s1738 = ssub.s32 128, 128
          %1739 = vsyncadd %s1725, %s1738
          %s1740 = smul.addr %s39, 128
          %s1741 = scalar_lea.hbm %s13, %s1740
          %s1743 = sshll.u32 %s1728, 4
          %s1744 = int_to_ptr.vmem [resolvable:$true] %s1743
          %1746 = dma.vmem_to_hbm [thread:$0]  %s1744, 128, %s1741, %s1725
        $region112: #{mha_bow_forward.1} parent=71 // pred_fallthru
          _
        // Predicated region
        $region113: #{mha_bow_forward.1} parent=71 // pred_check
          %p1747 = pneg %p371
        $region114: #{mha_bow_forward.1} parent=71 // pred_check_branch
          %1749 = sbr.rel (%p1747) target = $region116
        $region115: #{mha_bow_forward.1} parent=71 // pred_region
          %s1751 = ssub.s32 512, 512
          %1752 = vsyncadd %s1730, %s1751
          %s1753 = smul.addr %s39, 128
          %s1754 = scalar_lea.hbm %s14, %s1753
          %s1755 = sshll.u32 %s1733, 4
          %s1756 = int_to_ptr.vmem [resolvable:$true] %s1755
          %1761 = dma.vmem_to_hbm [thread:$0]  %s1756, 512, %s1754, %s1730, 128, 256, 8
        $region116: #{mha_bow_forward.1} parent=71 // pred_fallthru
          _
      $region72: #{mha_bow_forward.1} parent=5 // pred_fallthru
        _
      %p1762 = scmp.le.s32.totalorder 2, %s34
      // Predicated region
      $region117: #{mha_bow_forward.1} parent=5 // pred_check
        %p1763 = pneg %p1762
      $region118: #{mha_bow_forward.1} parent=5 // pred_check_branch
        %1765 = sbr.rel (%p1763) target = $region120
      $region119: #{mha_bow_forward.1} parent=5 // pred_region
        %s1766 = ssub.s32 %s34, 2
        // Predicated region
        $region121: #{mha_bow_forward.1} parent=119 // pred_check
          %p1767 = pneg %p351
        $region122: #{mha_bow_forward.1} parent=119 // pred_check_branch
          %1769 = sbr.rel (%p1767) target = $region124
        $region123: #{mha_bow_forward.1} parent=119 // pred_region
          %s1770 = sand.u32 %s336, 1
          %s1771 = scalar_lea.sflag [#allocation4], %s1770
          %s1772 = sand.u32 %s336, 1
          %s1773 = smul.addr %s1772, 8
          %s1774 = scalar_lea.vmem [#allocation17], %s1773
          %1775 = dma.done %s1771, 128
        $region124: #{mha_bow_forward.1} parent=119 // pred_fallthru
          _
        // Predicated region
        $region125: #{mha_bow_forward.1} parent=119 // pred_check
          %p1776 = pneg %p377
        $region126: #{mha_bow_forward.1} parent=119 // pred_check_branch
          %1778 = sbr.rel (%p1776) target = $region128
        $region127: #{mha_bow_forward.1} parent=119 // pred_region
          %s1779 = sand.u32 %s362, 1
          %s1780 = scalar_lea.sflag [#allocation19], %s1779
          %s1781 = sand.u32 %s362, 1
          %s1782 = smul.addr %s1781, 32
          %s1783 = scalar_lea.vmem [#allocation18], %s1782
          %1784 = dma.done %s1780, 512
        $region128: #{mha_bow_forward.1} parent=119 // pred_fallthru
          _
      $region120: #{mha_bow_forward.1} parent=5 // pred_fallthru
        _
    $region6: #{mha_bow_forward.1} parent=1 // loop_footer
      %s38 = sadd.s32 1, %s34
    $region7: #{mha_bow_forward.1} parent=1 // loop_footer_branch
      %33 = sbr.rel target = $region3
    $region8: #{mha_bow_forward.1} parent=1 // loop_exit
      _
    %1785 = vsyncpa [#allocation3], 1
    %s1786 = scalar_lea.sflag [#allocation3], 1
    %1787 = vsyncpa %s1786, 1
    %1788 = vsyncpa [#allocation6], 1
    %1789 = vsyncpa [#allocation9], 1
    %1790 = vsyncpa [#allocation12], 1
    %1791 = vsyncpa [#allocation15], 1
    %1792 = vsyncpa [#allocation4], 1
    %s1793 = scalar_lea.sflag [#allocation4], 1
    %1794 = vsyncpa %s1793, 1
    %1795 = vsyncpa [#allocation19], 1
    %s1796 = scalar_lea.sflag [#allocation19], 1
    %1797 = vsyncpa %s1796, 1

</llo_original>
